<compile_context>
chip_gen: v7x
topology: tpu7x:2x2x1
jax: 0.10.0
libtpu: 0.0.40
codegen_flags: <defaults>
</compile_context>

<pallas_src>
import functools

import numpy as np

import jax
import jax.numpy as jnp
from jax.experimental import pallas as pl
from jax.experimental.pallas import tpu as pltpu


MXU_DTYPE = jnp.float32          # set to jnp.bfloat16 to halve weight DMA bytes
LN_EPS = 1e-5                    # torch.nn.LayerNorm default


# ----------------------------- in-kernel helpers -----------------------------

def _erf_f32(x):
    # Abramowitz & Stegun 7.1.26 rational approximation, |abs err| <= 1.5e-7.
    # The divide goes to the EUP via pl.reciprocal(approx=True) (review item).
    p = 0.3275911
    a1, a2, a3, a4, a5 = (0.254829592, -0.284496736, 1.421413741,
                          -1.453152027, 1.061405429)
    s = jnp.where(x >= 0.0, 1.0, -1.0)
    z = jnp.abs(x)
    t = pl.reciprocal(1.0 + p * z, approx=True)
    poly = ((((a5 * t + a4) * t + a3) * t + a2) * t + a1) * t
    return s * (1.0 - poly * jnp.exp(-z * z))


def _gelu_exact(x):
    # torch.nn.GELU() default (exact erf formulation), evaluated in f32.
    return 0.5 * x * (1.0 + _erf_f32(x * 0.7071067811865476))


# ------------------------------ fused ConvBlock kernel ------------------------------

def _conv_block_kernel(x_ref, wd_ref, w1_ref, w2_ref, mats_ref, vecs_ref, o_ref,
                       *, eps):
    # x_ref   : (1, T, K_in) f32   lane-merged input (K_in = F_in*Cin)
    # wd_ref  : (3, K_in, K1)      downsample conv, per time tap (freq conv folded in)
    # w1_ref  : (3, K1, K1)        conv1 taps
    # w2_ref  : (3, K1, K1)        conv2 taps
    # mats_ref: (3, K1, K1) f32    [channel-mean pool, SE linear1 (kron/F), SE linear2]
    # vecs_ref: (9, K1)  f32       row vectors (biases, LN gamma/beta, SE biases), tiled
    # o_ref   : (1, T, K1) f32
    T = x_ref.shape[1]
    x = x_ref[0]                                   # (T, K_in) f32

    b_down = vecs_ref[0:1, :]
    ln1_g  = vecs_ref[1:2, :]
    ln1_b  = vecs_ref[2:3, :]
    b_c1   = vecs_ref[3:4, :]
    ln2_g  = vecs_ref[4:5, :]
    ln2_b  = vecs_ref[5:6, :]
    b_c2   = vecs_ref[6:7, :]
    se_b1  = vecs_ref[7:8, :]
    se_b2  = vecs_ref[8:9, :]

    ln_pool = mats_ref[0]                          # block-diag ones(C,C)/C
    se_w1   = mats_ref[1]                          # kron(ones(F,F)/F, W1)
    se_w2   = mats_ref[2]                          # kron(ones(F,F)/F, W2)

    def reflect_pad_time(a):
        # PyTorch 'reflect' pad of 1 along time, built in VMEM (no HBM jnp.pad).
        n = a.shape[0]
        return jnp.concatenate([a[1:2, :], a, a[n - 2:n - 1, :]], axis=0)

    def conv3(a, w_ref, bias):
        # 3 time taps; freq conv / reflect freq-pad / stride already folded into w_ref.
        ap = reflect_pad_time(a)
        acc = jnp.dot(ap[0:T, :].astype(MXU_DTYPE), w_ref[0],
                      preferred_element_type=jnp.float32)
        acc += jnp.dot(ap[1:1 + T, :].astype(MXU_DTYPE), w_ref[1],
                       preferred_element_type=jnp.float32)
        acc += jnp.dot(ap[2:2 + T, :].astype(MXU_DTYPE), w_ref[2],
                       preferred_element_type=jnp.float32)
        return acc + bias

    def gelu_ln(a, gamma, beta):
        # GELU hoisted: evaluated once on the full (T, K1) activation (review item).
        g = _gelu_exact(a)
        # LayerNorm over the C channels of each (t, f) position, done with two small
        # f32 matmuls against the block-diagonal averaging matrix (lane-merged layout).
        mu = jnp.dot(g, ln_pool, preferred_element_type=jnp.float32)
        d = g - mu
        var = jnp.dot(d * d, ln_pool, preferred_element_type=jnp.float32)
        return d * jax.lax.rsqrt(var + eps) * gamma + beta

    # x -> downsample conv (skip path y), then the two conv+GELU+LN stages.
    y = conv3(x, wd_ref, b_down)                                    # (T, K1)
    c1 = conv3(gelu_ln(y, ln1_g, ln1_b), w1_ref, b_c1)              # (T, K1)
    r = conv3(gelu_ln(c1, ln2_g, ln2_b), w2_ref, b_c2)              # (T, K1)

    # Squeeze-and-excitation: mean over (time, freq), linear -> relu -> linear ->
    # sigmoid, all lane-dense (freq-mean + channel mixing folded into se_w1/se_w2).
    m = jnp.sum(r, axis=0, keepdims=True) * (1.0 / T)               # (1, K1) time-mean
    h = jnp.maximum(
        jnp.dot(m, se_w1, preferred_element_type=jnp.float32) + se_b1, 0.0)
    z = jnp.dot(h, se_w2, preferred_element_type=jnp.float32) + se_b2
    gate = pl.reciprocal(1.0 + jnp.exp(-z), approx=True)            # sigmoid, EUP recip

    o_ref[0] = y + r * gate                                         # gated residual add


def conv_block_pallas(x_flat, p):
    """Fused ConvBlock.  x_flat: (B, T, F_in*Cin) f32 -> (B, T, F_out*C) f32."""
    B, T, K_in = x_flat.shape
    K1 = p["taps_down"].shape[-1]
    kernel = functools.partial(_conv_block_kernel, eps=LN_EPS)
    return pl.pallas_call(
        kernel,
        out_shape=jax.ShapeDtypeStruct((B, T, K1), jnp.float32),
        grid=(B,),
        in_specs=[
            pl.BlockSpec((1, T, K_in), lambda b: (b, 0, 0)),
            pl.BlockSpec(p["taps_down"].shape, lambda b: (0, 0, 0)),
            pl.BlockSpec(p["taps_c1"].shape, lambda b: (0, 0, 0)),
            pl.BlockSpec(p["taps_c2"].shape, lambda b: (0, 0, 0)),
            pl.BlockSpec(p["mats"].shape, lambda b: (0, 0, 0)),
            pl.BlockSpec(p["vecs"].shape, lambda b: (0, 0)),
        ],
        out_specs=pl.BlockSpec((1, T, K1), lambda b: (b, 0, 0)),
        compiler_params=pltpu.CompilerParams(dimension_semantics=("parallel",)),
    )(x_flat, p["taps_down"], p["taps_c1"], p["taps_c2"], p["mats"], p["vecs"])


def conv_block_forward(x, params):
    """Module-level forward.  x: (B, T, F, Cin) -> (B, T, ceil(F/2), channels)."""
    B, T, F, Cin = x.shape
    out = conv_block_pallas(x.reshape(B, T, F * Cin), params)       # free reshape
    F_out = (F - 1) // 2 + 1
    return out.reshape(B, T, F_out, out.shape[-1] // F_out)


# ------------------------ parameters: raw init + host-side prep -----------------------

def init_raw_params(key, f_in, c_in, c):
    """Random parameters mirroring the torch ConvBlock (conv taps (dt, df, cin, cout),
    LayerNorm gamma/beta over channels, SE linears)."""
    keys = iter(jax.random.split(key, 16))

    def nrm(shape, scale):
        return (scale * jax.random.normal(next(keys), shape)).astype(jnp.float32)

    return {
        "w_down": nrm((3, 3, c_in, c), (9.0 * c_in) ** -0.5), "b_down": nrm((c,), 0.05),
        "w_conv1": nrm((3, 3, c, c), (9.0 * c) ** -0.5), "b_conv1": nrm((c,), 0.05),
        "w_conv2": nrm((3, 3, c, c), (9.0 * c) ** -0.5), "b_conv2": nrm((c,), 0.05),
        "ln1_g": 1.0 + nrm((c,), 0.1), "ln1_b": nrm((c,), 0.1),
        "ln2_g": 1.0 + nrm((c,), 0.1), "ln2_b": nrm((c,), 0.1),
        "se_w1": nrm((c, c), c ** -0.5), "se_b1": nrm((c,), 0.05),
        "se_w2": nrm((c, c), c ** -0.5), "se_b2": nrm((c,), 0.05),
    }


def _build_tap3_weight(w, b, f_in, cin, f_out, cout, stride):
    """Expand a 3x3 conv ('same' reflect padding along freq, optional stride-2 over
    freq) into 3 per-time-tap matrices (f_in*cin, f_out*cout) plus a tiled bias."""
    w = np.asarray(w, np.float32)                 # (3, 3, cin, cout), taps (dt, df)
    b = np.asarray(b, np.float32)

    def refl(j):                                  # PyTorch 'reflect' (no edge repeat)
        if j < 0:
            return -j
        if j >= f_in:
            return 2 * f_in - 2 - j
        return j

    wbig = np.zeros((3, f_in * cin, f_out * cout), np.float32)
    for dt in range(3):
        for fo in range(f_out):
            for df in range(3):
                fi = refl(stride * fo + df - 1)
                wbig[dt, fi * cin:(fi + 1) * cin, fo * cout:(fo + 1) * cout] += w[dt, df]
    return wbig, np.tile(b, f_out)


def prepare_params(raw, f_in, c_in, c):
    """Host-side one-time transform into the packed kernel operands.
    NOTE (v5e review item): if F_out*C is not a multiple of 128, the output dim of the
    folded weights can be zero-padded to the next multiple of 128 (and cropped after
    the block) to avoid masked tail stores; not needed for the demo shapes."""
    f_out = (f_in - 1) // 2 + 1
    wd, bd = _build_tap3_weight(raw["w_down"], raw["b_down"], f_in, c_in, f_out, c, 2)
    w1, b1 = _build_tap3_weight(raw["w_conv1"], raw["b_conv1"], f_out, c, f_out, c, 1)
    w2, b2 = _build_tap3_weight(raw["w_conv2"], raw["b_conv2"], f_out, c, f_out, c, 1)

    # Channel-mean pooling matrix for LayerNorm (block-diagonal ones(C,C)/C) and the
    # kron-expanded SE linears (freq-mean folded in via the 1/F factor).
    ln_pool = np.kron(np.eye(f_out), np.ones((c, c))) / c
    se1 = np.kron(np.ones((f_out, f_out)) / f_out, np.asarray(raw["se_w1"], np.float32))
    se2 = np.kron(np.ones((f_out, f_out)) / f_out, np.asarray(raw["se_w2"], np.float32))

    def tile(v):
        return np.tile(np.asarray(v, np.float32), f_out)

    vecs = np.stack([bd, tile(raw["ln1_g"]), tile(raw["ln1_b"]), b1,
                     tile(raw["ln2_g"]), tile(raw["ln2_b"]), b2,
                     tile(raw["se_b1"]), tile(raw["se_b2"])], axis=0)

    return {
        "taps_down": jnp.asarray(wd, MXU_DTYPE),
        "taps_c1": jnp.asarray(w1, MXU_DTYPE),
        "taps_c2": jnp.asarray(w2, MXU_DTYPE),
        "mats": jnp.asarray(np.stack([ln_pool, se1, se2], axis=0), jnp.float32),
        "vecs": jnp.asarray(vecs, jnp.float32),
    }


# ------------------------------ pure-JAX reference ------------------------------

def conv_block_reference(x, raw, eps=LN_EPS):
    """Eval-mode ConvBlock reference directly from the raw (torch-layout) params."""
    def conv2d(h, w, b, stride_f):
        Bb, T, F, _ = h.shape
        hp = jnp.pad(h, ((0, 0), (1, 1), (1, 1), (0, 0)), mode="reflect")
        f_out = (F - 1) // stride_f + 1
        w = jnp.asarray(w, jnp.float32)
        acc = 0.0
        for dt in range(3):
            for df in range(3):
                hs = hp[:, dt:dt + T, df:df + stride_f * (f_out - 1) + 1:stride_f, :]
                acc = acc + jnp.einsum("btfi,io->btfo", hs, w[dt, df])
        return acc + jnp.asarray(b, jnp.float32)

    def ln(h, g, b):
        mu = jnp.mean(h, axis=-1, keepdims=True)
        var = jnp.mean((h - mu) ** 2, axis=-1, keepdims=True)
        return (h - mu) * jax.lax.rsqrt(var + eps) * g + b

    y = conv2d(x, raw["w_down"], raw["b_down"], 2)
    r = ln(jax.nn.gelu(y, approximate=False), raw["ln1_g"], raw["ln1_b"])
    r = conv2d(r, raw["w_conv1"], raw["b_conv1"], 1)
    r = ln(jax.nn.gelu(r, approximate=False), raw["ln2_g"], raw["ln2_b"])
    r = conv2d(r, raw["w_conv2"], raw["b_conv2"], 1)
    m = jnp.mean(r, axis=(1, 2), keepdims=True)
    h = jax.nn.relu(jnp.einsum("btfc,cd->btfd", m, raw["se_w1"]) + raw["se_b1"])
    gate = jax.nn.sigmoid(jnp.einsum("btfc,cd->btfd", h, raw["se_w2"]) + raw["se_b2"])
    return y + r * gate


# ------------------------------------ main ------------------------------------

if __name__ == "__main__":
    # Small shapes consistent with the module: ConvBlock input is (batch, time, freq,
    # channels_in).  F*Cin = 128 and F_out*channels = 128 keep every GEMM output
    # lane-dense; batch=4 gives each v7x TensorCore 2 pipelined grid steps.
    B, T, F, C_IN, C_OUT = 4, 16, 32, 4, 8

    key = jax.random.PRNGKey(0)
    k_x, k_p = jax.random.split(key)
    x = jax.random.normal(k_x, (B, T, F, C_IN), dtype=jnp.float32)

    raw = init_raw_params(k_p, F, C_IN, C_OUT)
    params = prepare_params(raw, F, C_IN, C_OUT)

    fwd = jax.jit(conv_block_forward)
    out = fwd(x, params)
    jax.block_until_ready(out)

    F_OUT = (F - 1) // 2 + 1
    assert out.shape == (B, T, F_OUT, C_OUT), out.shape
    assert bool(jnp.all(jnp.isfinite(out)))

    # Correctness vs. a pure-JAX f32 reference; loose tolerance covers the A&S erf
    # approximation and the approx-EUP reciprocals used inside the kernel.
    ref = jax.jit(conv_block_reference)(x, raw)
    max_err = float(jnp.max(jnp.abs(out - ref)))
    assert max_err < 5e-2, f"max abs err vs reference: {max_err}"

    print("KERNEL_OK")
</pallas_src>

<mosaic_0001>
module attributes {stable_mosaic.version = 11 : i64} {
  func.func @_conv_block_kernel(%arg0: i32, %arg1: memref<1x16x128xf32, #tpu.memory_space<vmem>>, %arg2: memref<3x128x128xf32, #tpu.memory_space<vmem>>, %arg3: memref<3x128x128xf32, #tpu.memory_space<vmem>>, %arg4: memref<3x128x128xf32, #tpu.memory_space<vmem>>, %arg5: memref<3x128x128xf32, #tpu.memory_space<vmem>>, %arg6: memref<9x128xf32, #tpu.memory_space<vmem>>, %arg7: memref<1x16x128xf32, #tpu.memory_space<vmem>>) attributes {dimension_semantics = [#tpu.dimension_semantics<parallel>], iteration_bounds = array<i64: 4>, scalar_prefetch = 0 : i64, scratch_operands = 0 : i64, tpu.core_type = #tpu.core_type<tc>, window_params = [{transform_indices = @transform_0, window_bounds = array<i64: 1, 16, 128>}, {pipeline_mode = #tpu.pipeline_mode<synchronous>, transform_indices = @transform_1, window_bounds = array<i64: 3, 128, 128>}, {pipeline_mode = #tpu.pipeline_mode<synchronous>, transform_indices = @transform_2, window_bounds = array<i64: 3, 128, 128>}, {pipeline_mode = #tpu.pipeline_mode<synchronous>, transform_indices = @transform_3, window_bounds = array<i64: 3, 128, 128>}, {pipeline_mode = #tpu.pipeline_mode<synchronous>, transform_indices = @transform_4, window_bounds = array<i64: 3, 128, 128>}, {pipeline_mode = #tpu.pipeline_mode<synchronous>, transform_indices = @transform_5, window_bounds = array<i64: 9, 128>}, {transform_indices = @transform_6, window_bounds = array<i64: 1, 16, 128>}]} {
    %c0 = arith.constant 0 : index
    %c0_0 = arith.constant 0 : index
    %c0_1 = arith.constant 0 : index
    %0 = vector.load %arg1[%c0, %c0_0, %c0_1] : memref<1x16x128xf32, #tpu.memory_space<vmem>>, vector<1x16x128xf32>
    %1 = vector.shape_cast %0 : vector<1x16x128xf32> to vector<16x128xf32>
    %c0_2 = arith.constant 0 : index
    %c0_3 = arith.constant 0 : index
    %2 = vector.load %arg6[%c0_2, %c0_3] : memref<9x128xf32, #tpu.memory_space<vmem>>, vector<1x128xf32>
    %c1 = arith.constant 1 : index
    %c0_4 = arith.constant 0 : index
    %3 = vector.load %arg6[%c1, %c0_4] : memref<9x128xf32, #tpu.memory_space<vmem>>, vector<1x128xf32>
    %c2 = arith.constant 2 : index
    %c0_5 = arith.constant 0 : index
    %4 = vector.load %arg6[%c2, %c0_5] : memref<9x128xf32, #tpu.memory_space<vmem>>, vector<1x128xf32>
    %c3 = arith.constant 3 : index
    %c0_6 = arith.constant 0 : index
    %5 = vector.load %arg6[%c3, %c0_6] : memref<9x128xf32, #tpu.memory_space<vmem>>, vector<1x128xf32>
    %c4 = arith.constant 4 : index
    %c0_7 = arith.constant 0 : index
    %6 = vector.load %arg6[%c4, %c0_7] : memref<9x128xf32, #tpu.memory_space<vmem>>, vector<1x128xf32>
    %c5 = arith.constant 5 : index
    %c0_8 = arith.constant 0 : index
    %7 = vector.load %arg6[%c5, %c0_8] : memref<9x128xf32, #tpu.memory_space<vmem>>, vector<1x128xf32>
    %c6 = arith.constant 6 : index
    %c0_9 = arith.constant 0 : index
    %8 = vector.load %arg6[%c6, %c0_9] : memref<9x128xf32, #tpu.memory_space<vmem>>, vector<1x128xf32>
    %c7 = arith.constant 7 : index
    %c0_10 = arith.constant 0 : index
    %9 = vector.load %arg6[%c7, %c0_10] : memref<9x128xf32, #tpu.memory_space<vmem>>, vector<1x128xf32>
    %c8 = arith.constant 8 : index
    %c0_11 = arith.constant 0 : index
    %10 = vector.load %arg6[%c8, %c0_11] : memref<9x128xf32, #tpu.memory_space<vmem>>, vector<1x128xf32>
    %c0_12 = arith.constant 0 : index
    %c0_13 = arith.constant 0 : index
    %c0_14 = arith.constant 0 : index
    %11 = vector.load %arg5[%c0_12, %c0_13, %c0_14] : memref<3x128x128xf32, #tpu.memory_space<vmem>>, vector<1x128x128xf32>
    %12 = vector.shape_cast %11 : vector<1x128x128xf32> to vector<128x128xf32>
    %c1_15 = arith.constant 1 : index
    %c0_16 = arith.constant 0 : index
    %c0_17 = arith.constant 0 : index
    %13 = vector.load %arg5[%c1_15, %c0_16, %c0_17] : memref<3x128x128xf32, #tpu.memory_space<vmem>>, vector<1x128x128xf32>
    %14 = vector.shape_cast %13 : vector<1x128x128xf32> to vector<128x128xf32>
    %c2_18 = arith.constant 2 : index
    %c0_19 = arith.constant 0 : index
    %c0_20 = arith.constant 0 : index
    %15 = vector.load %arg5[%c2_18, %c0_19, %c0_20] : memref<3x128x128xf32, #tpu.memory_space<vmem>>, vector<1x128x128xf32>
    %16 = vector.shape_cast %15 : vector<1x128x128xf32> to vector<128x128xf32>
    %17 = vector.extract_strided_slice %1 {offsets = [1, 0], sizes = [1, 128], strides = [1, 1]} : vector<16x128xf32> to vector<1x128xf32>
    %18 = vector.extract_strided_slice %1 {offsets = [14, 0], sizes = [1, 128], strides = [1, 1]} : vector<16x128xf32> to vector<1x128xf32>
    %19 = tpu.concatenate %17, %1, %18 in 0 : vector<1x128xf32>, vector<16x128xf32>, vector<1x128xf32> -> vector<18x128xf32>
    %20 = vector.extract_strided_slice %19 {offsets = [0, 0], sizes = [16, 128], strides = [1, 1]} : vector<18x128xf32> to vector<16x128xf32>
    %c0_21 = arith.constant 0 : index
    %c0_22 = arith.constant 0 : index
    %c0_23 = arith.constant 0 : index
    %21 = vector.load %arg2[%c0_21, %c0_22, %c0_23] : memref<3x128x128xf32, #tpu.memory_space<vmem>>, vector<1x128x128xf32>
    %22 = vector.shape_cast %21 : vector<1x128x128xf32> to vector<128x128xf32>
    %cst = arith.constant dense<0.000000e+00> : vector<16x128xf32>
    %23 = tpu.matmul %20, %22, %cst {dimension_numbers = #tpu.dot_dimension_numbers<[1], [0], [0], [1], [0, 0, 1, 1], [], []>} : vector<16x128xf32>, vector<128x128xf32>, vector<16x128xf32> -> vector<16x128xf32>
    %24 = vector.extract_strided_slice %19 {offsets = [1, 0], sizes = [16, 128], strides = [1, 1]} : vector<18x128xf32> to vector<16x128xf32>
    %c1_24 = arith.constant 1 : index
    %c0_25 = arith.constant 0 : index
    %c0_26 = arith.constant 0 : index
    %25 = vector.load %arg2[%c1_24, %c0_25, %c0_26] : memref<3x128x128xf32, #tpu.memory_space<vmem>>, vector<1x128x128xf32>
    %26 = vector.shape_cast %25 : vector<1x128x128xf32> to vector<128x128xf32>
    %cst_27 = arith.constant dense<0.000000e+00> : vector<16x128xf32>
    %27 = tpu.matmul %24, %26, %cst_27 {dimension_numbers = #tpu.dot_dimension_numbers<[1], [0], [0], [1], [0, 0, 1, 1], [], []>} : vector<16x128xf32>, vector<128x128xf32>, vector<16x128xf32> -> vector<16x128xf32>
    %28 = arith.addf %23, %27 : vector<16x128xf32>
    %29 = vector.extract_strided_slice %19 {offsets = [2, 0], sizes = [16, 128], strides = [1, 1]} : vector<18x128xf32> to vector<16x128xf32>
    %c2_28 = arith.constant 2 : index
    %c0_29 = arith.constant 0 : index
    %c0_30 = arith.constant 0 : index
    %30 = vector.load %arg2[%c2_28, %c0_29, %c0_30] : memref<3x128x128xf32, #tpu.memory_space<vmem>>, vector<1x128x128xf32>
    %31 = vector.shape_cast %30 : vector<1x128x128xf32> to vector<128x128xf32>
    %cst_31 = arith.constant dense<0.000000e+00> : vector<16x128xf32>
    %32 = tpu.matmul %29, %31, %cst_31 {dimension_numbers = #tpu.dot_dimension_numbers<[1], [0], [0], [1], [0, 0, 1, 1], [], []>} : vector<16x128xf32>, vector<128x128xf32>, vector<16x128xf32> -> vector<16x128xf32>
    %33 = arith.addf %28, %32 : vector<16x128xf32>
    %34 = vector.broadcast %2 : vector<1x128xf32> to vector<16x128xf32>
    %35 = arith.addf %33, %34 : vector<16x128xf32>
    %cst_32 = arith.constant 5.000000e-01 : f32
    %36 = vector.broadcast %cst_32 : f32 to vector<16x128xf32>
    %37 = arith.mulf %36, %35 : vector<16x128xf32>
    %cst_33 = arith.constant 0.707106769 : f32
    %38 = vector.broadcast %cst_33 : f32 to vector<16x128xf32>
    %39 = arith.mulf %35, %38 : vector<16x128xf32>
    %cst_34 = arith.constant 0.000000e+00 : f32
    %40 = vector.broadcast %cst_34 : f32 to vector<16x128xf32>
    %41 = arith.cmpf oge, %39, %40 : vector<16x128xf32>
    %cst_35 = arith.constant 1.000000e+00 : f32
    %cst_36 = arith.constant -1.000000e+00 : f32
    %42 = vector.broadcast %cst_35 : f32 to vector<16x128xf32>
    %43 = vector.broadcast %cst_36 : f32 to vector<16x128xf32>
    %44 = arith.select %41, %42, %43 : vector<16x128xi1>, vector<16x128xf32>
    %45 = math.absf %39 : vector<16x128xf32>
    %cst_37 = arith.constant 0.327591091 : f32
    %46 = vector.broadcast %cst_37 : f32 to vector<16x128xf32>
    %47 = arith.mulf %46, %45 : vector<16x128xf32>
    %cst_38 = arith.constant 1.000000e+00 : f32
    %48 = vector.broadcast %cst_38 : f32 to vector<16x128xf32>
    %49 = arith.addf %48, %47 : vector<16x128xf32>
    %50 = tpu.reciprocal %49 {approx = true} : vector<16x128xf32> -> vector<16x128xf32>
    %cst_39 = arith.constant 1.06140542 : f32
    %51 = vector.broadcast %cst_39 : f32 to vector<16x128xf32>
    %52 = arith.mulf %51, %50 : vector<16x128xf32>
    %cst_40 = arith.constant -1.45315206 : f32
    %53 = vector.broadcast %cst_40 : f32 to vector<16x128xf32>
    %54 = arith.addf %52, %53 : vector<16x128xf32>
    %55 = arith.mulf %54, %50 : vector<16x128xf32>
    %cst_41 = arith.constant 1.42141378 : f32
    %56 = vector.broadcast %cst_41 : f32 to vector<16x128xf32>
    %57 = arith.addf %55, %56 : vector<16x128xf32>
    %58 = arith.mulf %57, %50 : vector<16x128xf32>
    %cst_42 = arith.constant -0.284496725 : f32
    %59 = vector.broadcast %cst_42 : f32 to vector<16x128xf32>
    %60 = arith.addf %58, %59 : vector<16x128xf32>
    %61 = arith.mulf %60, %50 : vector<16x128xf32>
    %cst_43 = arith.constant 0.254829586 : f32
    %62 = vector.broadcast %cst_43 : f32 to vector<16x128xf32>
    %63 = arith.addf %61, %62 : vector<16x128xf32>
    %64 = arith.mulf %63, %50 : vector<16x128xf32>
    %cst_44 = arith.constant 0.000000e+00 : f32
    %65 = vector.broadcast %cst_44 : f32 to vector<16x128xf32>
    %66 = arith.subf %65, %45 : vector<16x128xf32>
    %67 = arith.mulf %66, %45 : vector<16x128xf32>
    %68 = math.exp %67 : vector<16x128xf32>
    %69 = arith.mulf %64, %68 : vector<16x128xf32>
    %cst_45 = arith.constant 1.000000e+00 : f32
    %70 = vector.broadcast %cst_45 : f32 to vector<16x128xf32>
    %71 = arith.subf %70, %69 : vector<16x128xf32>
    %72 = arith.mulf %44, %71 : vector<16x128xf32>
    %cst_46 = arith.constant 1.000000e+00 : f32
    %73 = vector.broadcast %cst_46 : f32 to vector<16x128xf32>
    %74 = arith.addf %73, %72 : vector<16x128xf32>
    %75 = arith.mulf %37, %74 : vector<16x128xf32>
    %cst_47 = arith.constant dense<0.000000e+00> : vector<16x128xf32>
    %76 = tpu.matmul %75, %12, %cst_47 {dimension_numbers = #tpu.dot_dimension_numbers<[1], [0], [0], [1], [0, 0, 1, 1], [], []>} : vector<16x128xf32>, vector<128x128xf32>, vector<16x128xf32> -> vector<16x128xf32>
    %77 = arith.subf %75, %76 : vector<16x128xf32>
    %78 = arith.mulf %77, %77 : vector<16x128xf32>
    %cst_48 = arith.constant dense<0.000000e+00> : vector<16x128xf32>
    %79 = tpu.matmul %78, %12, %cst_48 {dimension_numbers = #tpu.dot_dimension_numbers<[1], [0], [0], [1], [0, 0, 1, 1], [], []>} : vector<16x128xf32>, vector<128x128xf32>, vector<16x128xf32> -> vector<16x128xf32>
    %cst_49 = arith.constant 9.99999974E-6 : f32
    %80 = vector.broadcast %cst_49 : f32 to vector<16x128xf32>
    %81 = arith.addf %79, %80 : vector<16x128xf32>
    %82 = math.rsqrt %81 : vector<16x128xf32>
    %83 = arith.mulf %77, %82 : vector<16x128xf32>
    %84 = vector.broadcast %3 : vector<1x128xf32> to vector<16x128xf32>
    %85 = arith.mulf %83, %84 : vector<16x128xf32>
    %86 = vector.broadcast %4 : vector<1x128xf32> to vector<16x128xf32>
    %87 = arith.addf %85, %86 : vector<16x128xf32>
    %88 = vector.extract_strided_slice %87 {offsets = [1, 0], sizes = [1, 128], strides = [1, 1]} : vector<16x128xf32> to vector<1x128xf32>
    %89 = vector.extract_strided_slice %87 {offsets = [14, 0], sizes = [1, 128], strides = [1, 1]} : vector<16x128xf32> to vector<1x128xf32>
    %90 = tpu.concatenate %88, %87, %89 in 0 : vector<1x128xf32>, vector<16x128xf32>, vector<1x128xf32> -> vector<18x128xf32>
    %91 = vector.extract_strided_slice %90 {offsets = [0, 0], sizes = [16, 128], strides = [1, 1]} : vector<18x128xf32> to vector<16x128xf32>
    %c0_50 = arith.constant 0 : index
    %c0_51 = arith.constant 0 : index
    %c0_52 = arith.constant 0 : index
    %92 = vector.load %arg3[%c0_50, %c0_51, %c0_52] : memref<3x128x128xf32, #tpu.memory_space<vmem>>, vector<1x128x128xf32>
    %93 = vector.shape_cast %92 : vector<1x128x128xf32> to vector<128x128xf32>
    %cst_53 = arith.constant dense<0.000000e+00> : vector<16x128xf32>
    %94 = tpu.matmul %91, %93, %cst_53 {dimension_numbers = #tpu.dot_dimension_numbers<[1], [0], [0], [1], [0, 0, 1, 1], [], []>} : vector<16x128xf32>, vector<128x128xf32>, vector<16x128xf32> -> vector<16x128xf32>
    %95 = vector.extract_strided_slice %90 {offsets = [1, 0], sizes = [16, 128], strides = [1, 1]} : vector<18x128xf32> to vector<16x128xf32>
    %c1_54 = arith.constant 1 : index
    %c0_55 = arith.constant 0 : index
    %c0_56 = arith.constant 0 : index
    %96 = vector.load %arg3[%c1_54, %c0_55, %c0_56] : memref<3x128x128xf32, #tpu.memory_space<vmem>>, vector<1x128x128xf32>
    %97 = vector.shape_cast %96 : vector<1x128x128xf32> to vector<128x128xf32>
    %cst_57 = arith.constant dense<0.000000e+00> : vector<16x128xf32>
    %98 = tpu.matmul %95, %97, %cst_57 {dimension_numbers = #tpu.dot_dimension_numbers<[1], [0], [0], [1], [0, 0, 1, 1], [], []>} : vector<16x128xf32>, vector<128x128xf32>, vector<16x128xf32> -> vector<16x128xf32>
    %99 = arith.addf %94, %98 : vector<16x128xf32>
    %100 = vector.extract_strided_slice %90 {offsets = [2, 0], sizes = [16, 128], strides = [1, 1]} : vector<18x128xf32> to vector<16x128xf32>
    %c2_58 = arith.constant 2 : index
    %c0_59 = arith.constant 0 : index
    %c0_60 = arith.constant 0 : index
    %101 = vector.load %arg3[%c2_58, %c0_59, %c0_60] : memref<3x128x128xf32, #tpu.memory_space<vmem>>, vector<1x128x128xf32>
    %102 = vector.shape_cast %101 : vector<1x128x128xf32> to vector<128x128xf32>
    %cst_61 = arith.constant dense<0.000000e+00> : vector<16x128xf32>
    %103 = tpu.matmul %100, %102, %cst_61 {dimension_numbers = #tpu.dot_dimension_numbers<[1], [0], [0], [1], [0, 0, 1, 1], [], []>} : vector<16x128xf32>, vector<128x128xf32>, vector<16x128xf32> -> vector<16x128xf32>
    %104 = arith.addf %99, %103 : vector<16x128xf32>
    %105 = vector.broadcast %5 : vector<1x128xf32> to vector<16x128xf32>
    %106 = arith.addf %104, %105 : vector<16x128xf32>
    %cst_62 = arith.constant 5.000000e-01 : f32
    %107 = vector.broadcast %cst_62 : f32 to vector<16x128xf32>
    %108 = arith.mulf %107, %106 : vector<16x128xf32>
    %cst_63 = arith.constant 0.707106769 : f32
    %109 = vector.broadcast %cst_63 : f32 to vector<16x128xf32>
    %110 = arith.mulf %106, %109 : vector<16x128xf32>
    %cst_64 = arith.constant 0.000000e+00 : f32
    %111 = vector.broadcast %cst_64 : f32 to vector<16x128xf32>
    %112 = arith.cmpf oge, %110, %111 : vector<16x128xf32>
    %cst_65 = arith.constant 1.000000e+00 : f32
    %cst_66 = arith.constant -1.000000e+00 : f32
    %113 = vector.broadcast %cst_65 : f32 to vector<16x128xf32>
    %114 = vector.broadcast %cst_66 : f32 to vector<16x128xf32>
    %115 = arith.select %112, %113, %114 : vector<16x128xi1>, vector<16x128xf32>
    %116 = math.absf %110 : vector<16x128xf32>
    %cst_67 = arith.constant 0.327591091 : f32
    %117 = vector.broadcast %cst_67 : f32 to vector<16x128xf32>
    %118 = arith.mulf %117, %116 : vector<16x128xf32>
    %cst_68 = arith.constant 1.000000e+00 : f32
    %119 = vector.broadcast %cst_68 : f32 to vector<16x128xf32>
    %120 = arith.addf %119, %118 : vector<16x128xf32>
    %121 = tpu.reciprocal %120 {approx = true} : vector<16x128xf32> -> vector<16x128xf32>
    %cst_69 = arith.constant 1.06140542 : f32
    %122 = vector.broadcast %cst_69 : f32 to vector<16x128xf32>
    %123 = arith.mulf %122, %121 : vector<16x128xf32>
    %cst_70 = arith.constant -1.45315206 : f32
    %124 = vector.broadcast %cst_70 : f32 to vector<16x128xf32>
    %125 = arith.addf %123, %124 : vector<16x128xf32>
    %126 = arith.mulf %125, %121 : vector<16x128xf32>
    %cst_71 = arith.constant 1.42141378 : f32
    %127 = vector.broadcast %cst_71 : f32 to vector<16x128xf32>
    %128 = arith.addf %126, %127 : vector<16x128xf32>
    %129 = arith.mulf %128, %121 : vector<16x128xf32>
    %cst_72 = arith.constant -0.284496725 : f32
    %130 = vector.broadcast %cst_72 : f32 to vector<16x128xf32>
    %131 = arith.addf %129, %130 : vector<16x128xf32>
    %132 = arith.mulf %131, %121 : vector<16x128xf32>
    %cst_73 = arith.constant 0.254829586 : f32
    %133 = vector.broadcast %cst_73 : f32 to vector<16x128xf32>
    %134 = arith.addf %132, %133 : vector<16x128xf32>
    %135 = arith.mulf %134, %121 : vector<16x128xf32>
    %cst_74 = arith.constant 0.000000e+00 : f32
    %136 = vector.broadcast %cst_74 : f32 to vector<16x128xf32>
    %137 = arith.subf %136, %116 : vector<16x128xf32>
    %138 = arith.mulf %137, %116 : vector<16x128xf32>
    %139 = math.exp %138 : vector<16x128xf32>
    %140 = arith.mulf %135, %139 : vector<16x128xf32>
    %cst_75 = arith.constant 1.000000e+00 : f32
    %141 = vector.broadcast %cst_75 : f32 to vector<16x128xf32>
    %142 = arith.subf %141, %140 : vector<16x128xf32>
    %143 = arith.mulf %115, %142 : vector<16x128xf32>
    %cst_76 = arith.constant 1.000000e+00 : f32
    %144 = vector.broadcast %cst_76 : f32 to vector<16x128xf32>
    %145 = arith.addf %144, %143 : vector<16x128xf32>
    %146 = arith.mulf %108, %145 : vector<16x128xf32>
    %cst_77 = arith.constant dense<0.000000e+00> : vector<16x128xf32>
    %147 = tpu.matmul %146, %12, %cst_77 {dimension_numbers = #tpu.dot_dimension_numbers<[1], [0], [0], [1], [0, 0, 1, 1], [], []>} : vector<16x128xf32>, vector<128x128xf32>, vector<16x128xf32> -> vector<16x128xf32>
    %148 = arith.subf %146, %147 : vector<16x128xf32>
    %149 = arith.mulf %148, %148 : vector<16x128xf32>
    %cst_78 = arith.constant dense<0.000000e+00> : vector<16x128xf32>
    %150 = tpu.matmul %149, %12, %cst_78 {dimension_numbers = #tpu.dot_dimension_numbers<[1], [0], [0], [1], [0, 0, 1, 1], [], []>} : vector<16x128xf32>, vector<128x128xf32>, vector<16x128xf32> -> vector<16x128xf32>
    %cst_79 = arith.constant 9.99999974E-6 : f32
    %151 = vector.broadcast %cst_79 : f32 to vector<16x128xf32>
    %152 = arith.addf %150, %151 : vector<16x128xf32>
    %153 = math.rsqrt %152 : vector<16x128xf32>
    %154 = arith.mulf %148, %153 : vector<16x128xf32>
    %155 = vector.broadcast %6 : vector<1x128xf32> to vector<16x128xf32>
    %156 = arith.mulf %154, %155 : vector<16x128xf32>
    %157 = vector.broadcast %7 : vector<1x128xf32> to vector<16x128xf32>
    %158 = arith.addf %156, %157 : vector<16x128xf32>
    %159 = vector.extract_strided_slice %158 {offsets = [1, 0], sizes = [1, 128], strides = [1, 1]} : vector<16x128xf32> to vector<1x128xf32>
    %160 = vector.extract_strided_slice %158 {offsets = [14, 0], sizes = [1, 128], strides = [1, 1]} : vector<16x128xf32> to vector<1x128xf32>
    %161 = tpu.concatenate %159, %158, %160 in 0 : vector<1x128xf32>, vector<16x128xf32>, vector<1x128xf32> -> vector<18x128xf32>
    %162 = vector.extract_strided_slice %161 {offsets = [0, 0], sizes = [16, 128], strides = [1, 1]} : vector<18x128xf32> to vector<16x128xf32>
    %c0_80 = arith.constant 0 : index
    %c0_81 = arith.constant 0 : index
    %c0_82 = arith.constant 0 : index
    %163 = vector.load %arg4[%c0_80, %c0_81, %c0_82] : memref<3x128x128xf32, #tpu.memory_space<vmem>>, vector<1x128x128xf32>
    %164 = vector.shape_cast %163 : vector<1x128x128xf32> to vector<128x128xf32>
    %cst_83 = arith.constant dense<0.000000e+00> : vector<16x128xf32>
    %165 = tpu.matmul %162, %164, %cst_83 {dimension_numbers = #tpu.dot_dimension_numbers<[1], [0], [0], [1], [0, 0, 1, 1], [], []>} : vector<16x128xf32>, vector<128x128xf32>, vector<16x128xf32> -> vector<16x128xf32>
    %166 = vector.extract_strided_slice %161 {offsets = [1, 0], sizes = [16, 128], strides = [1, 1]} : vector<18x128xf32> to vector<16x128xf32>
    %c1_84 = arith.constant 1 : index
    %c0_85 = arith.constant 0 : index
    %c0_86 = arith.constant 0 : index
    %167 = vector.load %arg4[%c1_84, %c0_85, %c0_86] : memref<3x128x128xf32, #tpu.memory_space<vmem>>, vector<1x128x128xf32>
    %168 = vector.shape_cast %167 : vector<1x128x128xf32> to vector<128x128xf32>
    %cst_87 = arith.constant dense<0.000000e+00> : vector<16x128xf32>
    %169 = tpu.matmul %166, %168, %cst_87 {dimension_numbers = #tpu.dot_dimension_numbers<[1], [0], [0], [1], [0, 0, 1, 1], [], []>} : vector<16x128xf32>, vector<128x128xf32>, vector<16x128xf32> -> vector<16x128xf32>
    %170 = arith.addf %165, %169 : vector<16x128xf32>
    %171 = vector.extract_strided_slice %161 {offsets = [2, 0], sizes = [16, 128], strides = [1, 1]} : vector<18x128xf32> to vector<16x128xf32>
    %c2_88 = arith.constant 2 : index
    %c0_89 = arith.constant 0 : index
    %c0_90 = arith.constant 0 : index
    %172 = vector.load %arg4[%c2_88, %c0_89, %c0_90] : memref<3x128x128xf32, #tpu.memory_space<vmem>>, vector<1x128x128xf32>
    %173 = vector.shape_cast %172 : vector<1x128x128xf32> to vector<128x128xf32>
    %cst_91 = arith.constant dense<0.000000e+00> : vector<16x128xf32>
    %174 = tpu.matmul %171, %173, %cst_91 {dimension_numbers = #tpu.dot_dimension_numbers<[1], [0], [0], [1], [0, 0, 1, 1], [], []>} : vector<16x128xf32>, vector<128x128xf32>, vector<16x128xf32> -> vector<16x128xf32>
    %175 = arith.addf %170, %174 : vector<16x128xf32>
    %176 = vector.broadcast %8 : vector<1x128xf32> to vector<16x128xf32>
    %177 = arith.addf %175, %176 : vector<16x128xf32>
    %cst_92 = arith.constant dense<0.000000e+00> : vector<128xf32>
    %178 = vector.multi_reduction <add>, %177, %cst_92 [0] : vector<16x128xf32> to vector<128xf32>
    %179 = vector.shape_cast %178 : vector<128xf32> to vector<1x128xf32>
    %cst_93 = arith.constant 6.250000e-02 : f32
    %180 = vector.broadcast %cst_93 : f32 to vector<1x128xf32>
    %181 = arith.mulf %179, %180 : vector<1x128xf32>
    %cst_94 = arith.constant dense<0.000000e+00> : vector<1x128xf32>
    %182 = tpu.matmul %181, %14, %cst_94 {dimension_numbers = #tpu.dot_dimension_numbers<[1], [0], [0], [1], [0, 0, 1, 1], [], []>} : vector<1x128xf32>, vector<128x128xf32>, vector<1x128xf32> -> vector<1x128xf32>
    %183 = arith.addf %182, %9 : vector<1x128xf32>
    %cst_95 = arith.constant 0.000000e+00 : f32
    %184 = vector.broadcast %cst_95 : f32 to vector<1x128xf32>
    %185 = arith.maximumf %183, %184 : vector<1x128xf32>
    %cst_96 = arith.constant dense<0.000000e+00> : vector<1x128xf32>
    %186 = tpu.matmul %185, %16, %cst_96 {dimension_numbers = #tpu.dot_dimension_numbers<[1], [0], [0], [1], [0, 0, 1, 1], [], []>} : vector<1x128xf32>, vector<128x128xf32>, vector<1x128xf32> -> vector<1x128xf32>
    %187 = arith.addf %186, %10 : vector<1x128xf32>
    %cst_97 = arith.constant 0.000000e+00 : f32
    %188 = vector.broadcast %cst_97 : f32 to vector<1x128xf32>
    %189 = arith.subf %188, %187 : vector<1x128xf32>
    %190 = math.exp %189 : vector<1x128xf32>
    %cst_98 = arith.constant 1.000000e+00 : f32
    %191 = vector.broadcast %cst_98 : f32 to vector<1x128xf32>
    %192 = arith.addf %191, %190 : vector<1x128xf32>
    %193 = tpu.reciprocal %192 {approx = true} : vector<1x128xf32> -> vector<1x128xf32>
    %194 = vector.broadcast %193 : vector<1x128xf32> to vector<16x128xf32>
    %195 = arith.mulf %177, %194 : vector<16x128xf32>
    %196 = arith.addf %35, %195 : vector<16x128xf32>
    %c0_99 = arith.constant 0 : index
    %c0_100 = arith.constant 0 : index
    %c0_101 = arith.constant 0 : index
    %197 = vector.load %arg7[%c0_99, %c0_100, %c0_101] : memref<1x16x128xf32, #tpu.memory_space<vmem>>, vector<1x16x128xf32>
    %198 = vector.shape_cast %197 : vector<1x16x128xf32> to vector<16x128xf32>
    %199 = vector.shape_cast %196 : vector<16x128xf32> to vector<1x16x128xf32>
    tpu.vector_store %arg7[%c0_99, %c0_100, %c0_101], %199 {strides = array<i32>} : memref<1x16x128xf32, #tpu.memory_space<vmem>>, vector<1x16x128xf32>,
    return
  }
  func.func @transform_0(%arg0: i32) -> (i32, i32, i32) {
    %c0_i32 = arith.constant 0 : i32
    %c0_i32_0 = arith.constant 0 : i32
    %c0_i32_1 = arith.constant 0 : i32
    return %arg0, %c0_i32, %c0_i32_0 : i32, i32, i32
  }
  func.func @transform_1(%arg0: i32) -> (i32, i32, i32) {
    %c0_i32 = arith.constant 0 : i32
    %c0_i32_0 = arith.constant 0 : i32
    %c0_i32_1 = arith.constant 0 : i32
    %c0_i32_2 = arith.constant 0 : i32
    return %c0_i32, %c0_i32_0, %c0_i32_1 : i32, i32, i32
  }
  func.func @transform_2(%arg0: i32) -> (i32, i32, i32) {
    %c0_i32 = arith.constant 0 : i32
    %c0_i32_0 = arith.constant 0 : i32
    %c0_i32_1 = arith.constant 0 : i32
    %c0_i32_2 = arith.constant 0 : i32
    return %c0_i32, %c0_i32_0, %c0_i32_1 : i32, i32, i32
  }
  func.func @transform_3(%arg0: i32) -> (i32, i32, i32) {
    %c0_i32 = arith.constant 0 : i32
    %c0_i32_0 = arith.constant 0 : i32
    %c0_i32_1 = arith.constant 0 : i32
    %c0_i32_2 = arith.constant 0 : i32
    return %c0_i32, %c0_i32_0, %c0_i32_1 : i32, i32, i32
  }
  func.func @transform_4(%arg0: i32) -> (i32, i32, i32) {
    %c0_i32 = arith.constant 0 : i32
    %c0_i32_0 = arith.constant 0 : i32
    %c0_i32_1 = arith.constant 0 : i32
    %c0_i32_2 = arith.constant 0 : i32
    return %c0_i32, %c0_i32_0, %c0_i32_1 : i32, i32, i32
  }
  func.func @transform_5(%arg0: i32) -> (i32, i32) {
    %c0_i32 = arith.constant 0 : i32
    %c0_i32_0 = arith.constant 0 : i32
    %c0_i32_1 = arith.constant 0 : i32
    return %c0_i32, %c0_i32_0 : i32, i32
  }
  func.func @transform_6(%arg0: i32) -> (i32, i32, i32) {
    %c0_i32 = arith.constant 0 : i32
    %c0_i32_0 = arith.constant 0 : i32
    %c0_i32_1 = arith.constant 0 : i32
    return %arg0, %c0_i32, %c0_i32_0 : i32, i32, i32
  }
}

</mosaic_0001>

<llo_original>
// kernel: conv_block_forward.1
$region0: #{conv_block_forward.1}
  #allocation0 [shape = 'u32[]', space=smem, size = 0x4, offset = 0x4, fixed_abs, tag = 'smem constant byte address 0x4 - core index']
  #allocation1 [shape = 'u32[144,128]{1,0:T(1,128)}', space=vmem, size = 0x12000, scoped, tag = 'internal scratch']
  %s0 = inlined_call_operand.vmem [shape: f32[4,16,128], index: 0, kind: input, shape index: {}]
  %s1 = inlined_call_operand.vmem [shape: f32[3,128,128], index: 1, kind: input, shape index: {}]
  %s2 = inlined_call_operand.vmem [shape: f32[3,128,128], index: 2, kind: input, shape index: {}]
  %s3 = inlined_call_operand.vmem [shape: f32[3,128,128], index: 3, kind: input, shape index: {}]
  %s4 = inlined_call_operand.hbm [shape: f32[3,128,128], index: 4, kind: input, shape index: {}]
  %s5 = inlined_call_operand.vmem [shape: f32[9,128], index: 5, kind: input, shape index: {}]
  %s6 = inlined_call_operand.vmem [shape: f32[4,16,128], index: 6, kind: output, shape index: {}]
  %s7 = sld [smem:[#allocation0]]
  $region61: #{conv_block_forward.1} parent=0
    _
  %s9 = ssub.s32 1, %s7
  %s10 = scalar_select 0, %s9, %s7
  $region1: #{conv_block_forward.1} parent=0
    #allocation2 [shape = 'u8[196608]{0}', space=vmem, size = 0x30000, scoped, tag = 'input window, operand 4, single buffered']
    #allocation3 [shape = 's32[2]{0}', space=sflag, size = 0x8, scoped, tag = 'scoped memory for conv_block_forward.1']
    %11 = vsyncpa [#allocation3], 0
    loop: start=0, step=1, limit=6
    $region2: #{conv_block_forward.1} parent=1 // loop_pre_header
      _
    $region3: #{conv_block_forward.1} parent=1 // loop_header
      %s13 = sphi 0, %s17
      %p14 = scmp.ge.s32.totalorder %s13, 6
      %s23 = sphi 0, %s25
      %s26 = sphi 0, %s23
      %s27 = sphi 0, %s26
      %s43 = sphi 0, %s27
      %s47 = sphi 0, %s47
      %s49 = sphi 0, %s47
      %s50 = sphi 0, %s49
      %s64 = sphi 0, %s50
      %s68 = sphi 0, %s68
      %s70 = sphi 0, %s68
      %s71 = sphi 0, %s70
      %s85 = sphi 0, %s71
      %s89 = sphi 0, %s89
      %s91 = sphi 0, %s89
      %s92 = sphi 0, %s91
      %s106 = sphi 0, %s92
      %s110 = sphi 0, %s110
      %s112 = sphi 0, %s110
      %s113 = sphi 0, %s112
      %s127 = sphi 0, %s113
      %s131 = sphi 0, %s131
      %s133 = sphi 0, %s131
      %s134 = sphi 0, %s133
      %s148 = sphi 0, %s134
      %s154 = sphi 0, %s156
      %s157 = sphi 0, %s154
      %s158 = sphi 0, %s157
      %s174 = sphi 0, %s158
    $region4: #{conv_block_forward.1} parent=1 // loop_header_branch
      %16 = sbr.rel (%p14) target = $region8
    $region5: #{conv_block_forward.1} parent=1 // loop_body
      %s18 = ssub.s32 %s13, 1
      %s19 = ssub.s32 %s13, 2
      %s20 = sadd.s32 %s13, 1
      %s21 = ssub.s32 %s13, %s20
      %p22 = scmp.eq.s32.totalorder %s21, 0
      %s24 = sadd.s32 %s23, 1
      %s25 = scalar_select %p22, %s23, %s24
      %p28 = pneg %p22
      %p29 = scmp.eq.s32.totalorder %s13, 3
      %p30 = por %p28, %p29
      %p31 = scmp.ne.s32.totalorder %s23, %s26
      %p32 = scmp.eq.s32.totalorder %s13, 0
      %p33 = por %p31, %p32
      %p34 = scmp.ne.s32.totalorder %s23, %s26
      %p35 = scmp.eq.s32.totalorder %s18, 3
      %p36 = por %p34, %p35
      %p37 = scmp.ne.s32.totalorder %s26, %s27
      %p38 = scmp.eq.s32.totalorder %s18, 0
      %p39 = por %p37, %p38
      %p40 = scmp.ne.s32.totalorder %s26, %s27
      %p41 = scmp.eq.s32.totalorder %s19, 3
      %p42 = por %p40, %p41
      %p44 = scmp.ne.s32.totalorder %s27, %s43
      %p45 = scmp.eq.s32.totalorder %s19, 0
      %p46 = por %p44, %p45
      %s48 = sadd.s32 %s47, 1
      %p51 = scmp.eq.s32.totalorder %s13, 3
      %p52 = scmp.ne.s32.totalorder %s47, %s49
      %p53 = scmp.eq.s32.totalorder %s13, 0
      %p54 = por %p52, %p53
      %p55 = scmp.ne.s32.totalorder %s47, %s49
      %p56 = scmp.eq.s32.totalorder %s18, 3
      %p57 = por %p55, %p56
      %p58 = scmp.ne.s32.totalorder %s49, %s50
      %p59 = scmp.eq.s32.totalorder %s18, 0
      %p60 = por %p58, %p59
      %p61 = scmp.ne.s32.totalorder %s49, %s50
      %p62 = scmp.eq.s32.totalorder %s19, 3
      %p63 = por %p61, %p62
      %p65 = scmp.ne.s32.totalorder %s50, %s64
      %p66 = scmp.eq.s32.totalorder %s19, 0
      %p67 = por %p65, %p66
      %s69 = sadd.s32 %s68, 1
      %p72 = scmp.eq.s32.totalorder %s13, 3
      %p73 = scmp.ne.s32.totalorder %s68, %s70
      %p74 = scmp.eq.s32.totalorder %s13, 0
      %p75 = por %p73, %p74
      %p76 = scmp.ne.s32.totalorder %s68, %s70
      %p77 = scmp.eq.s32.totalorder %s18, 3
      %p78 = por %p76, %p77
      %p79 = scmp.ne.s32.totalorder %s70, %s71
      %p80 = scmp.eq.s32.totalorder %s18, 0
      %p81 = por %p79, %p80
      %p82 = scmp.ne.s32.totalorder %s70, %s71
      %p83 = scmp.eq.s32.totalorder %s19, 3
      %p84 = por %p82, %p83
      %p86 = scmp.ne.s32.totalorder %s71, %s85
      %p87 = scmp.eq.s32.totalorder %s19, 0
      %p88 = por %p86, %p87
      %s90 = sadd.s32 %s89, 1
      %p93 = scmp.eq.s32.totalorder %s13, 3
      %p94 = scmp.ne.s32.totalorder %s89, %s91
      %p95 = scmp.eq.s32.totalorder %s13, 0
      %p96 = por %p94, %p95
      %p97 = scmp.ne.s32.totalorder %s89, %s91
      %p98 = scmp.eq.s32.totalorder %s18, 3
      %p99 = por %p97, %p98
      %p100 = scmp.ne.s32.totalorder %s91, %s92
      %p101 = scmp.eq.s32.totalorder %s18, 0
      %p102 = por %p100, %p101
      %p103 = scmp.ne.s32.totalorder %s91, %s92
      %p104 = scmp.eq.s32.totalorder %s19, 3
      %p105 = por %p103, %p104
      %p107 = scmp.ne.s32.totalorder %s92, %s106
      %p108 = scmp.eq.s32.totalorder %s19, 0
      %p109 = por %p107, %p108
      %s111 = sadd.s32 %s110, 1
      %p114 = scmp.eq.s32.totalorder %s13, 3
      %p115 = scmp.ne.s32.totalorder %s110, %s112
      %p116 = scmp.eq.s32.totalorder %s13, 0
      %p117 = por %p115, %p116
      %p118 = scmp.ne.s32.totalorder %s110, %s112
      %p119 = scmp.eq.s32.totalorder %s18, 3
      %p120 = por %p118, %p119
      %p121 = scmp.ne.s32.totalorder %s112, %s113
      %p122 = scmp.eq.s32.totalorder %s18, 0
      %p123 = por %p121, %p122
      %p124 = scmp.ne.s32.totalorder %s112, %s113
      %p125 = scmp.eq.s32.totalorder %s19, 3
      %p126 = por %p124, %p125
      %p128 = scmp.ne.s32.totalorder %s113, %s127
      %p129 = scmp.eq.s32.totalorder %s19, 0
      %p130 = por %p128, %p129
      %s132 = sadd.s32 %s131, 1
      %p135 = scmp.eq.s32.totalorder %s13, 3
      %p136 = scmp.ne.s32.totalorder %s131, %s133
      %p137 = scmp.eq.s32.totalorder %s13, 0
      %p138 = por %p136, %p137
      %p139 = scmp.ne.s32.totalorder %s131, %s133
      %p140 = scmp.eq.s32.totalorder %s18, 3
      %p141 = por %p139, %p140
      %p142 = scmp.ne.s32.totalorder %s133, %s134
      %p143 = scmp.eq.s32.totalorder %s18, 0
      %p144 = por %p142, %p143
      %p145 = scmp.ne.s32.totalorder %s133, %s134
      %p146 = scmp.eq.s32.totalorder %s19, 3
      %p147 = por %p145, %p146
      %p149 = scmp.ne.s32.totalorder %s134, %s148
      %p150 = scmp.eq.s32.totalorder %s19, 0
      %p151 = por %p149, %p150
      %s152 = ssub.s32 %s13, %s20
      %p153 = scmp.eq.s32.totalorder %s152, 0
      %s155 = sadd.s32 %s154, 1
      %s156 = scalar_select %p153, %s154, %s155
      %p159 = pneg %p153
      %p160 = scmp.eq.s32.totalorder %s13, 3
      %p161 = por %p159, %p160
      %p162 = scmp.ne.s32.totalorder %s154, %s157
      %p163 = scmp.eq.s32.totalorder %s13, 0
      %p164 = por %p162, %p163
      %p165 = scmp.ne.s32.totalorder %s154, %s157
      %p166 = scmp.eq.s32.totalorder %s18, 3
      %p167 = por %p165, %p166
      %p168 = scmp.ne.s32.totalorder %s157, %s158
      %p169 = scmp.eq.s32.totalorder %s18, 0
      %p170 = por %p168, %p169
      %p171 = scmp.ne.s32.totalorder %s157, %s158
      %p172 = scmp.eq.s32.totalorder %s19, 3
      %p173 = por %p171, %p172
      %p175 = scmp.ne.s32.totalorder %s158, %s174
      %p176 = scmp.eq.s32.totalorder %s19, 0
      %p177 = por %p175, %p176
      %p178 = scmp.le.s32.totalorder 1, %s13
      %p179 = scmp.lt.s32.totalorder %s13, 5
      %p180 = pnand %p178, %p179
      %p181 = pneg %p180
      // Predicated region
      $region9: #{conv_block_forward.1} parent=5 // pred_check
        _
      $region10: #{conv_block_forward.1} parent=5 // pred_check_branch
        %183 = sbr.rel (%p180) target = $region12
      $region11: #{conv_block_forward.1} parent=5 // pred_region
        %s184 = ssub.s32 %s13, 1
        // Predicated region
        $region13: #{conv_block_forward.1} parent=11 // pred_check
          %p185 = pneg %p60
        $region14: #{conv_block_forward.1} parent=11 // pred_check_branch
          %187 = sbr.rel (%p185) target = $region16
        $region15: #{conv_block_forward.1} parent=11 // pred_region
          _
        $region16: #{conv_block_forward.1} parent=11 // pred_fallthru
          _
        // Predicated region
        $region17: #{conv_block_forward.1} parent=11 // pred_check
          %p188 = pneg %p81
        $region18: #{conv_block_forward.1} parent=11 // pred_check_branch
          %190 = sbr.rel (%p188) target = $region20
        $region19: #{conv_block_forward.1} parent=11 // pred_region
          _
        $region20: #{conv_block_forward.1} parent=11 // pred_fallthru
          _
        // Predicated region
        $region21: #{conv_block_forward.1} parent=11 // pred_check
          %p191 = pneg %p102
        $region22: #{conv_block_forward.1} parent=11 // pred_check_branch
          %193 = sbr.rel (%p191) target = $region24
        $region23: #{conv_block_forward.1} parent=11 // pred_region
          _
        $region24: #{conv_block_forward.1} parent=11 // pred_fallthru
          _
        // Predicated region
        $region25: #{conv_block_forward.1} parent=11 // pred_check
          %p194 = pneg %p123
        $region26: #{conv_block_forward.1} parent=11 // pred_check_branch
          %196 = sbr.rel (%p194) target = $region28
        $region27: #{conv_block_forward.1} parent=11 // pred_region
          %s198 = ssub.s32 6144, 6144
          %199 = vsyncadd [#allocation3], %s198
          %s200 = sshll.u32 [#allocation2], 4
          %s201 = int_to_ptr.vmem [resolvable:$true] %s200
          %206 = dma.hbm_to_vmem [thread:$0]  %s4, 6144, %s201, [#allocation3], 128, 128, 8
        $region28: #{conv_block_forward.1} parent=11 // pred_fallthru
          _
        // Predicated region
        $region29: #{conv_block_forward.1} parent=11 // pred_check
          %p207 = pneg %p144
        $region30: #{conv_block_forward.1} parent=11 // pred_check_branch
          %209 = sbr.rel (%p207) target = $region32
        $region31: #{conv_block_forward.1} parent=11 // pred_region
          _
        $region32: #{conv_block_forward.1} parent=11 // pred_fallthru
          _
      $region12: #{conv_block_forward.1} parent=5 // pred_fallthru
        _
      %p210 = scmp.lt.s32.totalorder %s13, 4
      // Predicated region
      $region33: #{conv_block_forward.1} parent=5 // pred_check
        %p211 = pneg %p210
      $region34: #{conv_block_forward.1} parent=5 // pred_check_branch
        %213 = sbr.rel (%p211) target = $region36
      $region35: #{conv_block_forward.1} parent=5 // pred_region
        // Predicated region
        $region37: #{conv_block_forward.1} parent=35 // pred_check
          %p214 = pneg %p33
        $region38: #{conv_block_forward.1} parent=35 // pred_check_branch
          %216 = sbr.rel (%p214) target = $region40
        $region39: #{conv_block_forward.1} parent=35 // pred_region
          %p217 = scmp.lt.s32.totalorder %s13, 3
          %s218 = scalar_select %p217, %s13, 3
          %s219 = smul.addr %s218, 2
          %s220 = smul.addr %s219, 8
          %s221 = scalar_lea.vmem %s0, %s220
        $region40: #{conv_block_forward.1} parent=35 // pred_fallthru
          _
      $region36: #{conv_block_forward.1} parent=5 // pred_fallthru
        _
      %p222 = scmp.le.s32.totalorder 1, %s13
      %p223 = scmp.lt.s32.totalorder %s13, 5
      %p224 = pnand %p222, %p223
      %p225 = pneg %p224
      // Predicated region
      $region41: #{conv_block_forward.1} parent=5 // pred_check
        _
      $region42: #{conv_block_forward.1} parent=5 // pred_check_branch
        %227 = sbr.rel (%p224) target = $region44
      $region43: #{conv_block_forward.1} parent=5 // pred_region
        %s228 = ssub.s32 %s13, 1
        // Predicated region
        $region45: #{conv_block_forward.1} parent=43 // pred_check
          %p229 = pneg %p123
        $region46: #{conv_block_forward.1} parent=43 // pred_check_branch
          %231 = sbr.rel (%p229) target = $region48
        $region47: #{conv_block_forward.1} parent=43 // pred_region
          %232 = dma.done [#allocation3], 6144
        $region48: #{conv_block_forward.1} parent=43 // pred_fallthru
          _
        %p233 = scmp.lt.s32.totalorder %s18, 3
        %s234 = scalar_select %p233, %s18, 3
        %s235 = smul.addr %s234, 2
        %s236 = smul.addr %s235, 8
        %s237 = scalar_lea.vmem %s0, %s236
        %p238 = pneg %p39
        %p239 = pneg %p36
        %p240 = pneg %p60
        %p241 = pneg %p57
        %p242 = pneg %p81
        %p243 = pneg %p78
        %p244 = pneg %p102
        %p245 = pneg %p99
        %p246 = pneg %p123
        %p247 = pneg %p120
        %p248 = pneg %p144
        %p249 = pneg %p141
        %p250 = pneg %p170
        %p251 = pneg %p167
        %p252 = scmp.lt.s32.totalorder %s18, 3
        %s253 = scalar_select %p252, %s18, 3
        %s254 = smul.addr %s253, 2
        %s255 = smul.addr %s254, 8
        %s256 = scalar_lea.vmem %s6, %s255
        %p257 = scmp.lt.s32.totalorder %s18, 3
        %s258 = scalar_select %p257, %s18, 3
        %s259 = smul.addr %s258, 2
        %s260 = smul.addr %s259, 8
        %s261 = scalar_lea.vmem %s0, %s260
        %p262 = scmp.lt.s32.totalorder %s18, 3
        %s263 = scalar_select %p262, %s18, 3
        %s264 = smul.addr %s263, 2
        %s265 = smul.addr %s264, 8
        %s266 = scalar_lea.vmem %s6, %s265
        %v267 = vld [vmem:[%s261] sm:$0xff]
        %v268 = vld [vmem:[%s261 + $0x8] sm:$0xff]
        %v269 = vld [vmem:[%s5] sm:$0x1]
        %v270 = vld [vmem:[%s5 + $0x1] sm:$0x1]
        %v271 = vld [vmem:[%s5 + $0x2] sm:$0x1]
        %v272 = vld [vmem:[%s5 + $0x3] sm:$0x1]
        %v273 = vld [vmem:[%s5 + $0x4] sm:$0x1]
        %v274 = vld [vmem:[%s5 + $0x5] sm:$0x1]
        %v275 = vld [vmem:[%s5 + $0x6] sm:$0x1]
        %v276 = vld [vmem:[%s5 + $0x7] sm:$0x1]
        %v277 = vld [vmem:[%s5 + $0x8] sm:$0x1]
        %v278 = vld [vmem:[#allocation2] sm:$0xff]
        %v279 = vld [vmem:[#allocation2 + $0x8] sm:$0xff]
        %v280 = vld [vmem:[#allocation2 + $0x10] sm:$0xff]
        %v281 = vld [vmem:[#allocation2 + $0x18] sm:$0xff]
        %v282 = vld [vmem:[#allocation2 + $0x20] sm:$0xff]
        %v283 = vld [vmem:[#allocation2 + $0x28] sm:$0xff]
        %v284 = vld [vmem:[#allocation2 + $0x30] sm:$0xff]
        %v285 = vld [vmem:[#allocation2 + $0x38] sm:$0xff]
        %v286 = vld [vmem:[#allocation2 + $0x40] sm:$0xff]
        %v287 = vld [vmem:[#allocation2 + $0x48] sm:$0xff]
        %v288 = vld [vmem:[#allocation2 + $0x50] sm:$0xff]
        %v289 = vld [vmem:[#allocation2 + $0x58] sm:$0xff]
        %v290 = vld [vmem:[#allocation2 + $0x60] sm:$0xff]
        %v291 = vld [vmem:[#allocation2 + $0x68] sm:$0xff]
        %v292 = vld [vmem:[#allocation2 + $0x70] sm:$0xff]
        %v293 = vld [vmem:[#allocation2 + $0x78] sm:$0xff]
        %s294 = scalar_lea.vmem [#allocation2], 128
        %v295 = vld [vmem:[%s294] sm:$0xff]
        %v296 = vld [vmem:[%s294 + $0x8] sm:$0xff]
        %v297 = vld [vmem:[%s294 + $0x10] sm:$0xff]
        %v298 = vld [vmem:[%s294 + $0x18] sm:$0xff]
        %v299 = vld [vmem:[%s294 + $0x20] sm:$0xff]
        %v300 = vld [vmem:[%s294 + $0x28] sm:$0xff]
        %v301 = vld [vmem:[%s294 + $0x30] sm:$0xff]
        %v302 = vld [vmem:[%s294 + $0x38] sm:$0xff]
        %v303 = vld [vmem:[%s294 + $0x40] sm:$0xff]
        %v304 = vld [vmem:[%s294 + $0x48] sm:$0xff]
        %v305 = vld [vmem:[%s294 + $0x50] sm:$0xff]
        %v306 = vld [vmem:[%s294 + $0x58] sm:$0xff]
        %v307 = vld [vmem:[%s294 + $0x60] sm:$0xff]
        %v308 = vld [vmem:[%s294 + $0x68] sm:$0xff]
        %v309 = vld [vmem:[%s294 + $0x70] sm:$0xff]
        %v310 = vld [vmem:[%s294 + $0x78] sm:$0xff]
        %s311 = scalar_lea.vmem [#allocation2], 256
        %v312 = vld [vmem:[%s311] sm:$0xff]
        %v313 = vld [vmem:[%s311 + $0x8] sm:$0xff]
        %v314 = vld [vmem:[%s311 + $0x10] sm:$0xff]
        %v315 = vld [vmem:[%s311 + $0x18] sm:$0xff]
        %v316 = vld [vmem:[%s311 + $0x20] sm:$0xff]
        %v317 = vld [vmem:[%s311 + $0x28] sm:$0xff]
        %v318 = vld [vmem:[%s311 + $0x30] sm:$0xff]
        %v319 = vld [vmem:[%s311 + $0x38] sm:$0xff]
        %v320 = vld [vmem:[%s311 + $0x40] sm:$0xff]
        %v321 = vld [vmem:[%s311 + $0x48] sm:$0xff]
        %v322 = vld [vmem:[%s311 + $0x50] sm:$0xff]
        %v323 = vld [vmem:[%s311 + $0x58] sm:$0xff]
        %v324 = vld [vmem:[%s311 + $0x60] sm:$0xff]
        %v325 = vld [vmem:[%s311 + $0x68] sm:$0xff]
        %v326 = vld [vmem:[%s311 + $0x70] sm:$0xff]
        %v327 = vld [vmem:[%s311 + $0x78] sm:$0xff]
        %v329 = vrot.slane %v267, 1
        %vm332 = vcmask 1040384
        %v333 = vrot.slane %v267, 7
        %v334 = vrot.slane %v268, 7
        %v335 = vsel %vm332, %v333, %v334
        %v339 = vrot.slane %v268, 5
        %v341 = vsel %vm332, %v329, %v333
        %v342 = vsel %vm332, %v334, %v339
        %v343 = vld [vmem:[%s1] sm:$0xff]
        %v344 = vld [vmem:[%s1 + $0x8] sm:$0xff]
        %v345 = vld [vmem:[%s1 + $0x10] sm:$0xff]
        %v346 = vld [vmem:[%s1 + $0x18] sm:$0xff]
        %v347 = vld [vmem:[%s1 + $0x20] sm:$0xff]
        %v348 = vld [vmem:[%s1 + $0x28] sm:$0xff]
        %v349 = vld [vmem:[%s1 + $0x30] sm:$0xff]
        %v350 = vld [vmem:[%s1 + $0x38] sm:$0xff]
        %v351 = vld [vmem:[%s1 + $0x40] sm:$0xff]
        %v352 = vld [vmem:[%s1 + $0x48] sm:$0xff]
        %v353 = vld [vmem:[%s1 + $0x50] sm:$0xff]
        %v354 = vld [vmem:[%s1 + $0x58] sm:$0xff]
        %v355 = vld [vmem:[%s1 + $0x60] sm:$0xff]
        %v356 = vld [vmem:[%s1 + $0x68] sm:$0xff]
        %v357 = vld [vmem:[%s1 + $0x70] sm:$0xff]
        %v358 = vld [vmem:[%s1 + $0x78] sm:$0xff]
        %s359 = scalar_lea.vmem %s1, 128
        %v360 = vld [vmem:[%s359] sm:$0xff]
        %v361 = vld [vmem:[%s359 + $0x8] sm:$0xff]
        %v362 = vld [vmem:[%s359 + $0x10] sm:$0xff]
        %v363 = vld [vmem:[%s359 + $0x18] sm:$0xff]
        %v364 = vld [vmem:[%s359 + $0x20] sm:$0xff]
        %v365 = vld [vmem:[%s359 + $0x28] sm:$0xff]
        %v366 = vld [vmem:[%s359 + $0x30] sm:$0xff]
        %v367 = vld [vmem:[%s359 + $0x38] sm:$0xff]
        %v368 = vld [vmem:[%s359 + $0x40] sm:$0xff]
        %v369 = vld [vmem:[%s359 + $0x48] sm:$0xff]
        %v370 = vld [vmem:[%s359 + $0x50] sm:$0xff]
        %v371 = vld [vmem:[%s359 + $0x58] sm:$0xff]
        %v372 = vld [vmem:[%s359 + $0x60] sm:$0xff]
        %v373 = vld [vmem:[%s359 + $0x68] sm:$0xff]
        %v374 = vld [vmem:[%s359 + $0x70] sm:$0xff]
        %v375 = vld [vmem:[%s359 + $0x78] sm:$0xff]
        %vm378 = vcmask 1046528
        %v379 = vrot.slane %v341, 1
        %v380 = vrot.slane %v335, 1
        %v381 = vsel %vm378, %v379, %v380
        %v382 = vrot.slane %v342, 1
        %v383 = vsel %vm378, %v380, %v382
        %386 = vmatprep.subr.mxu0 0.0
        %387 = vmatpush1.msra.mxu0 %v360
        %388 = vmatprep.subr.mxu0 0.0
        %389 = vmatpush1.msra.mxu0 %v361
        %390 = vmatprep.subr.mxu0 0.0
        %391 = vmatpush1.msra.mxu0 %v362
        %392 = vmatprep.subr.mxu0 0.0
        %393 = vmatpush1.msra.mxu0 %v363
        %394 = vmatprep.subr.mxu0 0.0
        %395 = vmatpush1.msra.mxu0 %v364
        %396 = vmatprep.subr.mxu0 0.0
        %397 = vmatpush1.msra.mxu0 %v365
        %398 = vmatprep.subr.mxu0 0.0
        %399 = vmatpush1.msra.mxu0 %v366
        %400 = vmatprep.subr.mxu0 0.0
        %401 = vmatpush1.msra.mxu0 %v367
        %402 = vmatprep.subr.mxu0 0.0
        %403 = vmatpush1.msra.mxu0 %v368
        %404 = vmatprep.subr.mxu0 0.0
        %405 = vmatpush1.msra.mxu0 %v369
        %406 = vmatprep.subr.mxu0 0.0
        %407 = vmatpush1.msra.mxu0 %v370
        %408 = vmatprep.subr.mxu0 0.0
        %409 = vmatpush1.msra.mxu0 %v371
        %410 = vmatprep.subr.mxu0 0.0
        %411 = vmatpush1.msra.mxu0 %v372
        %412 = vmatprep.subr.mxu0 0.0
        %413 = vmatpush1.msra.mxu0 %v373
        %414 = vmatprep.subr.mxu0 0.0
        %415 = vmatpush1.msra.mxu0 %v374
        %416 = vmatprep.subr.mxu0 0.0
        %417 = vmatpush1.msra.mxu0 %v375
        %418 = vmatprep.subr.mxu0 0.0
        %419 = vmatpush1.msra.mxu0 0.0
        %420 = vmatprep.subr.mxu0 0.0
        %421 = vmatpush1.msra.mxu0 0.0
        %422 = vmatprep.subr.mxu0 0.0
        %423 = vmatpush1.msra.mxu0 0.0
        %424 = vmatprep.subr.mxu0 0.0
        %425 = vmatpush1.msra.mxu0 0.0
        %426 = vmatprep.subr.mxu0 0.0
        %427 = vmatpush1.msra.mxu0 0.0
        %428 = vmatprep.subr.mxu0 0.0
        %429 = vmatpush1.msra.mxu0 0.0
        %430 = vmatprep.subr.mxu0 0.0
        %431 = vmatpush1.msra.mxu0 0.0
        %432 = vmatprep.subr.mxu0 0.0
        %433 = vmatpush1.msra.mxu0 0.0
        %434 = vmatprep.subr.mxu0 0.0
        %435 = vmatpush1.msra.mxu0 0.0
        %436 = vmatprep.subr.mxu0 0.0
        %437 = vmatpush1.msra.mxu0 0.0
        %438 = vmatprep.subr.mxu0 0.0
        %439 = vmatpush1.msra.mxu0 0.0
        %440 = vmatprep.subr.mxu0 0.0
        %441 = vmatpush1.msra.mxu0 0.0
        %442 = vmatprep.subr.mxu0 0.0
        %443 = vmatpush1.msra.mxu0 0.0
        %444 = vmatprep.subr.mxu0 0.0
        %445 = vmatpush1.msra.mxu0 0.0
        %446 = vmatprep.subr.mxu0 0.0
        %447 = vmatpush1.msra.mxu0 0.0
        %448 = vmatprep.subr.mxu0 0.0
        %449 = vmatpush1.msra.mxu0 0.0
        %450 = vmatprep.mubr.f32.mxu0 0.0
        %451 = vmatmul.mubr.f32.gmra.mrb[0].mxu0 %v381
        %v452 = vpop.f32.mrb[0].mxu0
        %v453 = vadd.f32 0.0, %v452
        %v454 = vpop.f32.mrb[0].mxu0
        %455 = vmatprep.mubr.f32.mxu0 0.0
        %456 = vmatmul.mubr.f32.gmra.mrb[0].mxu0 %v383
        %v457 = vpop.f32.mrb[0].mxu0
        %v458 = vadd.f32 0.0, %v457
        %v459 = vpop.f32.mrb[0].mxu0
        %460 = vdwg.mxu0
        %461 = vmatprep.subr.mxu0 0.0
        %462 = vmatpush1.msra.mxu0 %v343
        %463 = vmatprep.subr.mxu0 0.0
        %464 = vmatpush1.msra.mxu0 %v344
        %465 = vmatprep.subr.mxu0 0.0
        %466 = vmatpush1.msra.mxu0 %v345
        %467 = vmatprep.subr.mxu0 0.0
        %468 = vmatpush1.msra.mxu0 %v346
        %469 = vmatprep.subr.mxu0 0.0
        %470 = vmatpush1.msra.mxu0 %v347
        %471 = vmatprep.subr.mxu0 0.0
        %472 = vmatpush1.msra.mxu0 %v348
        %473 = vmatprep.subr.mxu0 0.0
        %474 = vmatpush1.msra.mxu0 %v349
        %475 = vmatprep.subr.mxu0 0.0
        %476 = vmatpush1.msra.mxu0 %v350
        %477 = vmatprep.subr.mxu0 0.0
        %478 = vmatpush1.msra.mxu0 %v351
        %479 = vmatprep.subr.mxu0 0.0
        %480 = vmatpush1.msra.mxu0 %v352
        %481 = vmatprep.subr.mxu0 0.0
        %482 = vmatpush1.msra.mxu0 %v353
        %483 = vmatprep.subr.mxu0 0.0
        %484 = vmatpush1.msra.mxu0 %v354
        %485 = vmatprep.subr.mxu0 0.0
        %486 = vmatpush1.msra.mxu0 %v355
        %487 = vmatprep.subr.mxu0 0.0
        %488 = vmatpush1.msra.mxu0 %v356
        %489 = vmatprep.subr.mxu0 0.0
        %490 = vmatpush1.msra.mxu0 %v357
        %491 = vmatprep.subr.mxu0 0.0
        %492 = vmatpush1.msra.mxu0 %v358
        %493 = vmatprep.subr.mxu0 0.0
        %494 = vmatpush1.msra.mxu0 0.0
        %495 = vmatprep.subr.mxu0 0.0
        %496 = vmatpush1.msra.mxu0 0.0
        %497 = vmatprep.subr.mxu0 0.0
        %498 = vmatpush1.msra.mxu0 0.0
        %499 = vmatprep.subr.mxu0 0.0
        %500 = vmatpush1.msra.mxu0 0.0
        %501 = vmatprep.subr.mxu0 0.0
        %502 = vmatpush1.msra.mxu0 0.0
        %503 = vmatprep.subr.mxu0 0.0
        %504 = vmatpush1.msra.mxu0 0.0
        %505 = vmatprep.subr.mxu0 0.0
        %506 = vmatpush1.msra.mxu0 0.0
        %507 = vmatprep.subr.mxu0 0.0
        %508 = vmatpush1.msra.mxu0 0.0
        %509 = vmatprep.subr.mxu0 0.0
        %510 = vmatpush1.msra.mxu0 0.0
        %511 = vmatprep.subr.mxu0 0.0
        %512 = vmatpush1.msra.mxu0 0.0
        %513 = vmatprep.subr.mxu0 0.0
        %514 = vmatpush1.msra.mxu0 0.0
        %515 = vmatprep.subr.mxu0 0.0
        %516 = vmatpush1.msra.mxu0 0.0
        %517 = vmatprep.subr.mxu0 0.0
        %518 = vmatpush1.msra.mxu0 0.0
        %519 = vmatprep.subr.mxu0 0.0
        %520 = vmatpush1.msra.mxu0 0.0
        %521 = vmatprep.subr.mxu0 0.0
        %522 = vmatpush1.msra.mxu0 0.0
        %523 = vmatprep.subr.mxu0 0.0
        %524 = vmatpush1.msra.mxu0 0.0
        %525 = vmatprep.mubr.f32.mxu0 0.0
        %526 = vmatmul.mubr.f32.gmra.mrb[0].mxu0 %v341
        %v527 = vpop.f32.mrb[0].mxu0
        %v528 = vadd.f32 %v453, %v527
        %v529 = vpop.f32.mrb[0].mxu0
        %530 = vmatprep.mubr.f32.mxu0 0.0
        %531 = vmatmul.mubr.f32.gmra.mrb[0].mxu0 %v335
        %v532 = vpop.f32.mrb[0].mxu0
        %v533 = vadd.f32 %v458, %v532
        %v534 = vpop.f32.mrb[0].mxu0
        %535 = vdwg.mxu0
        %s536 = scalar_lea.vmem %s1, 256
        %v537 = vld [vmem:[%s536] sm:$0xff]
        %v538 = vld [vmem:[%s536 + $0x8] sm:$0xff]
        %v539 = vld [vmem:[%s536 + $0x10] sm:$0xff]
        %v540 = vld [vmem:[%s536 + $0x18] sm:$0xff]
        %v541 = vld [vmem:[%s536 + $0x20] sm:$0xff]
        %v542 = vld [vmem:[%s536 + $0x28] sm:$0xff]
        %v543 = vld [vmem:[%s536 + $0x30] sm:$0xff]
        %v544 = vld [vmem:[%s536 + $0x38] sm:$0xff]
        %v545 = vld [vmem:[%s536 + $0x40] sm:$0xff]
        %v546 = vld [vmem:[%s536 + $0x48] sm:$0xff]
        %v547 = vld [vmem:[%s536 + $0x50] sm:$0xff]
        %v548 = vld [vmem:[%s536 + $0x58] sm:$0xff]
        %v549 = vld [vmem:[%s536 + $0x60] sm:$0xff]
        %v550 = vld [vmem:[%s536 + $0x68] sm:$0xff]
        %v551 = vld [vmem:[%s536 + $0x70] sm:$0xff]
        %v552 = vld [vmem:[%s536 + $0x78] sm:$0xff]
        %vm553 = vcmask 1045504
        %v554 = vrot.slane %v341, 2
        %v555 = vrot.slane %v335, 2
        %v556 = vsel %vm553, %v554, %v555
        %v557 = vrot.slane %v342, 2
        %v558 = vsel %vm553, %v555, %v557
        %561 = vmatprep.subr.mxu0 0.0
        %562 = vmatpush1.msra.mxu0 %v537
        %563 = vmatprep.subr.mxu0 0.0
        %564 = vmatpush1.msra.mxu0 %v538
        %565 = vmatprep.subr.mxu0 0.0
        %566 = vmatpush1.msra.mxu0 %v539
        %567 = vmatprep.subr.mxu0 0.0
        %568 = vmatpush1.msra.mxu0 %v540
        %569 = vmatprep.subr.mxu0 0.0
        %570 = vmatpush1.msra.mxu0 %v541
        %571 = vmatprep.subr.mxu0 0.0
        %572 = vmatpush1.msra.mxu0 %v542
        %573 = vmatprep.subr.mxu0 0.0
        %574 = vmatpush1.msra.mxu0 %v543
        %575 = vmatprep.subr.mxu0 0.0
        %576 = vmatpush1.msra.mxu0 %v544
        %577 = vmatprep.subr.mxu0 0.0
        %578 = vmatpush1.msra.mxu0 %v545
        %579 = vmatprep.subr.mxu0 0.0
        %580 = vmatpush1.msra.mxu0 %v546
        %581 = vmatprep.subr.mxu0 0.0
        %582 = vmatpush1.msra.mxu0 %v547
        %583 = vmatprep.subr.mxu0 0.0
        %584 = vmatpush1.msra.mxu0 %v548
        %585 = vmatprep.subr.mxu0 0.0
        %586 = vmatpush1.msra.mxu0 %v549
        %587 = vmatprep.subr.mxu0 0.0
        %588 = vmatpush1.msra.mxu0 %v550
        %589 = vmatprep.subr.mxu0 0.0
        %590 = vmatpush1.msra.mxu0 %v551
        %591 = vmatprep.subr.mxu0 0.0
        %592 = vmatpush1.msra.mxu0 %v552
        %593 = vmatprep.subr.mxu0 0.0
        %594 = vmatpush1.msra.mxu0 0.0
        %595 = vmatprep.subr.mxu0 0.0
        %596 = vmatpush1.msra.mxu0 0.0
        %597 = vmatprep.subr.mxu0 0.0
        %598 = vmatpush1.msra.mxu0 0.0
        %599 = vmatprep.subr.mxu0 0.0
        %600 = vmatpush1.msra.mxu0 0.0
        %601 = vmatprep.subr.mxu0 0.0
        %602 = vmatpush1.msra.mxu0 0.0
        %603 = vmatprep.subr.mxu0 0.0
        %604 = vmatpush1.msra.mxu0 0.0
        %605 = vmatprep.subr.mxu0 0.0
        %606 = vmatpush1.msra.mxu0 0.0
        %607 = vmatprep.subr.mxu0 0.0
        %608 = vmatpush1.msra.mxu0 0.0
        %609 = vmatprep.subr.mxu0 0.0
        %610 = vmatpush1.msra.mxu0 0.0
        %611 = vmatprep.subr.mxu0 0.0
        %612 = vmatpush1.msra.mxu0 0.0
        %613 = vmatprep.subr.mxu0 0.0
        %614 = vmatpush1.msra.mxu0 0.0
        %615 = vmatprep.subr.mxu0 0.0
        %616 = vmatpush1.msra.mxu0 0.0
        %617 = vmatprep.subr.mxu0 0.0
        %618 = vmatpush1.msra.mxu0 0.0
        %619 = vmatprep.subr.mxu0 0.0
        %620 = vmatpush1.msra.mxu0 0.0
        %621 = vmatprep.subr.mxu0 0.0
        %622 = vmatpush1.msra.mxu0 0.0
        %623 = vmatprep.subr.mxu0 0.0
        %624 = vmatpush1.msra.mxu0 0.0
        %625 = vmatprep.mubr.f32.mxu0 0.0
        %626 = vmatmul.mubr.f32.gmra.mrb[0].mxu0 %v556
        %v627 = vpop.f32.mrb[0].mxu0
        %v628 = vadd.f32 0.0, %v627
        %v629 = vpop.f32.mrb[0].mxu0
        %630 = vmatprep.mubr.f32.mxu0 0.0
        %631 = vmatmul.mubr.f32.gmra.mrb[0].mxu0 %v558
        %v632 = vpop.f32.mrb[0].mxu0
        %v633 = vadd.f32 0.0, %v632
        %v634 = vpop.f32.mrb[0].mxu0
        %635 = vdwg.mxu0
        %v636 = vadd.f32 %v528, %v628
        %v637 = vadd.f32 %v533, %v633
        %v638 = vlaneseq
        %v639 = vshrl.u32 %v638, 7
        %v640 = vsub.s32 0, %v639
        %v641 = vrot.slane %v269, %v640
        %v642 = vadd.f32 %v636, %v641
        %v643 = vadd.f32 %v637, %v641
        %v644 = vmul.f32 %v642, 0.5
        %v645 = vmul.f32 %v643, 0.5
        %v646 = vmul.f32 %v642, 0.70710677
        %v647 = vmul.f32 %v643, 0.70710677
        %vm648 = vcmp.ge.f32.partialorder %v646, 0.0
        %vm649 = vcmp.ge.f32.partialorder %v647, 0.0
        %v650 = vsel %vm648, 1.0, -1.0
        %v651 = vsel %vm649, 1.0, -1.0
        %v652 = vand.u32 2147483647, %v646
        %v653 = vand.u32 2147483647, %v647
        %v654 = vmul.f32 %v652, 0.3275911
        %v655 = vmul.f32 %v653, 0.3275911
        %v656 = vadd.f32 %v654, 1.0
        %v657 = vadd.f32 %v655, 1.0
        %v658 = vrcp.pop %v656
        %v659 = vrcp.pop %v657
        %v660 = vmul.f32 %v658, 1.0614054
        %v661 = vmul.f32 %v659, 1.0614054
        %v662 = vadd.f32 %v660, -1.4531521
        %v663 = vadd.f32 %v661, -1.4531521
        %v664 = vmul.f32 %v662, %v658
        %v665 = vmul.f32 %v663, %v659
        %v666 = vadd.f32 %v664, 1.4214138
        %v667 = vadd.f32 %v665, 1.4214138
        %v668 = vmul.f32 %v666, %v658
        %v669 = vmul.f32 %v667, %v659
        %v670 = vadd.f32 %v668, -0.28449672
        %v671 = vadd.f32 %v669, -0.28449672
        %v672 = vmul.f32 %v670, %v658
        %v673 = vmul.f32 %v671, %v659
        %v674 = vadd.f32 %v672, 0.2548296
        %v675 = vadd.f32 %v673, 0.2548296
        %v676 = vmul.f32 %v674, %v658
        %v677 = vmul.f32 %v675, %v659
        %v678 = vsub.f32 0.0, %v652
        %v679 = vsub.f32 0.0, %v653
        %v680 = vmul.f32 %v678, %v652
        %v681 = vmul.f32 %v679, %v653
        %v682 = vmul.f32 %v680, 1.442695
        %v683 = vpow.pop %v682
        %v684 = vmul.f32 %v681, 1.442695
        %v685 = vpow.pop %v684
        %v686 = vmul.f32 %v676, %v683
        %v687 = vmul.f32 %v677, %v685
        %v688 = vsub.f32 1.0, %v686
        %v689 = vsub.f32 1.0, %v687
        %v690 = vmul.f32 %v650, %v688
        %v691 = vmul.f32 %v651, %v689
        %v692 = vadd.f32 %v690, 1.0
        %v693 = vadd.f32 %v691, 1.0
        %v694 = vmul.f32 %v644, %v692
        %v695 = vmul.f32 %v645, %v693
        %696 = vmatprep.subr.mxu0 0.0
        %697 = vmatpush1.msra.mxu0 %v278
        %698 = vmatprep.subr.mxu0 0.0
        %699 = vmatpush1.msra.mxu0 %v279
        %700 = vmatprep.subr.mxu0 0.0
        %701 = vmatpush1.msra.mxu0 %v280
        %702 = vmatprep.subr.mxu0 0.0
        %703 = vmatpush1.msra.mxu0 %v281
        %704 = vmatprep.subr.mxu0 0.0
        %705 = vmatpush1.msra.mxu0 %v282
        %706 = vmatprep.subr.mxu0 0.0
        %707 = vmatpush1.msra.mxu0 %v283
        %708 = vmatprep.subr.mxu0 0.0
        %709 = vmatpush1.msra.mxu0 %v284
        %710 = vmatprep.subr.mxu0 0.0
        %711 = vmatpush1.msra.mxu0 %v285
        %712 = vmatprep.subr.mxu0 0.0
        %713 = vmatpush1.msra.mxu0 %v286
        %714 = vmatprep.subr.mxu0 0.0
        %715 = vmatpush1.msra.mxu0 %v287
        %716 = vmatprep.subr.mxu0 0.0
        %717 = vmatpush1.msra.mxu0 %v288
        %718 = vmatprep.subr.mxu0 0.0
        %719 = vmatpush1.msra.mxu0 %v289
        %720 = vmatprep.subr.mxu0 0.0
        %721 = vmatpush1.msra.mxu0 %v290
        %722 = vmatprep.subr.mxu0 0.0
        %723 = vmatpush1.msra.mxu0 %v291
        %724 = vmatprep.subr.mxu0 0.0
        %725 = vmatpush1.msra.mxu0 %v292
        %726 = vmatprep.subr.mxu0 0.0
        %727 = vmatpush1.msra.mxu0 %v293
        %728 = vmatprep.subr.mxu0 0.0
        %729 = vmatpush1.msra.mxu0 0.0
        %730 = vmatprep.subr.mxu0 0.0
        %731 = vmatpush1.msra.mxu0 0.0
        %732 = vmatprep.subr.mxu0 0.0
        %733 = vmatpush1.msra.mxu0 0.0
        %734 = vmatprep.subr.mxu0 0.0
        %735 = vmatpush1.msra.mxu0 0.0
        %736 = vmatprep.subr.mxu0 0.0
        %737 = vmatpush1.msra.mxu0 0.0
        %738 = vmatprep.subr.mxu0 0.0
        %739 = vmatpush1.msra.mxu0 0.0
        %740 = vmatprep.subr.mxu0 0.0
        %741 = vmatpush1.msra.mxu0 0.0
        %742 = vmatprep.subr.mxu0 0.0
        %743 = vmatpush1.msra.mxu0 0.0
        %744 = vmatprep.subr.mxu0 0.0
        %745 = vmatpush1.msra.mxu0 0.0
        %746 = vmatprep.subr.mxu0 0.0
        %747 = vmatpush1.msra.mxu0 0.0
        %748 = vmatprep.subr.mxu0 0.0
        %749 = vmatpush1.msra.mxu0 0.0
        %750 = vmatprep.subr.mxu0 0.0
        %751 = vmatpush1.msra.mxu0 0.0
        %752 = vmatprep.subr.mxu0 0.0
        %753 = vmatpush1.msra.mxu0 0.0
        %754 = vmatprep.subr.mxu0 0.0
        %755 = vmatpush1.msra.mxu0 0.0
        %756 = vmatprep.subr.mxu0 0.0
        %757 = vmatpush1.msra.mxu0 0.0
        %758 = vmatprep.subr.mxu0 0.0
        %759 = vmatpush1.msra.mxu0 0.0
        %760 = vmatprep.mubr.f32.mxu0 0.0
        %761 = vmatmul.mubr.f32.gmra.mrb[0].mxu0 %v694
        %v762 = vpop.f32.mrb[0].mxu0
        %v763 = vadd.f32 0.0, %v762
        %v764 = vpop.f32.mrb[0].mxu0
        %765 = vmatprep.mubr.f32.mxu0 0.0
        %766 = vmatmul.mubr.f32.gmra.mrb[0].mxu0 %v695
        %v767 = vpop.f32.mrb[0].mxu0
        %v768 = vadd.f32 0.0, %v767
        %v769 = vpop.f32.mrb[0].mxu0
        %770 = vdwg.mxu0
        %v771 = vsub.f32 %v694, %v763
        %v772 = vsub.f32 %v695, %v768
        %v773 = vmul.f32 %v771, %v771
        %v774 = vmul.f32 %v772, %v772
        %775 = vmatprep.subr.mxu0 0.0
        %776 = vmatpush1.msra.mxu0 %v278
        %777 = vmatprep.subr.mxu0 0.0
        %778 = vmatpush1.msra.mxu0 %v279
        %779 = vmatprep.subr.mxu0 0.0
        %780 = vmatpush1.msra.mxu0 %v280
        %781 = vmatprep.subr.mxu0 0.0
        %782 = vmatpush1.msra.mxu0 %v281
        %783 = vmatprep.subr.mxu0 0.0
        %784 = vmatpush1.msra.mxu0 %v282
        %785 = vmatprep.subr.mxu0 0.0
        %786 = vmatpush1.msra.mxu0 %v283
        %787 = vmatprep.subr.mxu0 0.0
        %788 = vmatpush1.msra.mxu0 %v284
        %789 = vmatprep.subr.mxu0 0.0
        %790 = vmatpush1.msra.mxu0 %v285
        %791 = vmatprep.subr.mxu0 0.0
        %792 = vmatpush1.msra.mxu0 %v286
        %793 = vmatprep.subr.mxu0 0.0
        %794 = vmatpush1.msra.mxu0 %v287
        %795 = vmatprep.subr.mxu0 0.0
        %796 = vmatpush1.msra.mxu0 %v288
        %797 = vmatprep.subr.mxu0 0.0
        %798 = vmatpush1.msra.mxu0 %v289
        %799 = vmatprep.subr.mxu0 0.0
        %800 = vmatpush1.msra.mxu0 %v290
        %801 = vmatprep.subr.mxu0 0.0
        %802 = vmatpush1.msra.mxu0 %v291
        %803 = vmatprep.subr.mxu0 0.0
        %804 = vmatpush1.msra.mxu0 %v292
        %805 = vmatprep.subr.mxu0 0.0
        %806 = vmatpush1.msra.mxu0 %v293
        %807 = vmatprep.subr.mxu0 0.0
        %808 = vmatpush1.msra.mxu0 0.0
        %809 = vmatprep.subr.mxu0 0.0
        %810 = vmatpush1.msra.mxu0 0.0
        %811 = vmatprep.subr.mxu0 0.0
        %812 = vmatpush1.msra.mxu0 0.0
        %813 = vmatprep.subr.mxu0 0.0
        %814 = vmatpush1.msra.mxu0 0.0
        %815 = vmatprep.subr.mxu0 0.0
        %816 = vmatpush1.msra.mxu0 0.0
        %817 = vmatprep.subr.mxu0 0.0
        %818 = vmatpush1.msra.mxu0 0.0
        %819 = vmatprep.subr.mxu0 0.0
        %820 = vmatpush1.msra.mxu0 0.0
        %821 = vmatprep.subr.mxu0 0.0
        %822 = vmatpush1.msra.mxu0 0.0
        %823 = vmatprep.subr.mxu0 0.0
        %824 = vmatpush1.msra.mxu0 0.0
        %825 = vmatprep.subr.mxu0 0.0
        %826 = vmatpush1.msra.mxu0 0.0
        %827 = vmatprep.subr.mxu0 0.0
        %828 = vmatpush1.msra.mxu0 0.0
        %829 = vmatprep.subr.mxu0 0.0
        %830 = vmatpush1.msra.mxu0 0.0
        %831 = vmatprep.subr.mxu0 0.0
        %832 = vmatpush1.msra.mxu0 0.0
        %833 = vmatprep.subr.mxu0 0.0
        %834 = vmatpush1.msra.mxu0 0.0
        %835 = vmatprep.subr.mxu0 0.0
        %836 = vmatpush1.msra.mxu0 0.0
        %837 = vmatprep.subr.mxu0 0.0
        %838 = vmatpush1.msra.mxu0 0.0
        %839 = vmatprep.mubr.f32.mxu0 0.0
        %840 = vmatmul.mubr.f32.gmra.mrb[0].mxu0 %v773
        %v841 = vpop.f32.mrb[0].mxu0
        %v842 = vadd.f32 1e-05, %v841
        %v843 = vpop.f32.mrb[0].mxu0
        %844 = vmatprep.mubr.f32.mxu0 0.0
        %845 = vmatmul.mubr.f32.gmra.mrb[0].mxu0 %v774
        %v846 = vpop.f32.mrb[0].mxu0
        %v847 = vadd.f32 1e-05, %v846
        %v848 = vpop.f32.mrb[0].mxu0
        %849 = vdwg.mxu0
        %v850 = vrsqrt.pop %v842
        %v851 = vrsqrt.pop %v847
        %v852 = vmul.f32 %v771, %v850
        %v853 = vmul.f32 %v772, %v851
        %v854 = vlaneseq
        %v855 = vshrl.u32 %v854, 7
        %v856 = vsub.s32 0, %v855
        %v857 = vrot.slane %v270, %v856
        %v858 = vmul.f32 %v852, %v857
        %v859 = vmul.f32 %v853, %v857
        %v860 = vlaneseq
        %v861 = vshrl.u32 %v860, 7
        %v862 = vsub.s32 0, %v861
        %v863 = vrot.slane %v271, %v862
        %v864 = vadd.f32 %v858, %v863
        %v865 = vadd.f32 %v859, %v863
        %v867 = vrot.slane %v864, 1
        %v870 = vrot.slane %v864, 7
        %v871 = vrot.slane %v865, 7
        %v872 = vsel %vm332, %v870, %v871
        %v876 = vrot.slane %v865, 5
        %v878 = vsel %vm332, %v867, %v870
        %v879 = vsel %vm332, %v871, %v876
        %v880 = vld [vmem:[%s2] sm:$0xff]
        %v881 = vld [vmem:[%s2 + $0x8] sm:$0xff]
        %v882 = vld [vmem:[%s2 + $0x10] sm:$0xff]
        %v883 = vld [vmem:[%s2 + $0x18] sm:$0xff]
        %v884 = vld [vmem:[%s2 + $0x20] sm:$0xff]
        %v885 = vld [vmem:[%s2 + $0x28] sm:$0xff]
        %v886 = vld [vmem:[%s2 + $0x30] sm:$0xff]
        %v887 = vld [vmem:[%s2 + $0x38] sm:$0xff]
        %v888 = vld [vmem:[%s2 + $0x40] sm:$0xff]
        %v889 = vld [vmem:[%s2 + $0x48] sm:$0xff]
        %v890 = vld [vmem:[%s2 + $0x50] sm:$0xff]
        %v891 = vld [vmem:[%s2 + $0x58] sm:$0xff]
        %v892 = vld [vmem:[%s2 + $0x60] sm:$0xff]
        %v893 = vld [vmem:[%s2 + $0x68] sm:$0xff]
        %v894 = vld [vmem:[%s2 + $0x70] sm:$0xff]
        %v895 = vld [vmem:[%s2 + $0x78] sm:$0xff]
        %s896 = scalar_lea.vmem %s2, 128
        %v897 = vld [vmem:[%s896] sm:$0xff]
        %v898 = vld [vmem:[%s896 + $0x8] sm:$0xff]
        %v899 = vld [vmem:[%s896 + $0x10] sm:$0xff]
        %v900 = vld [vmem:[%s896 + $0x18] sm:$0xff]
        %v901 = vld [vmem:[%s896 + $0x20] sm:$0xff]
        %v902 = vld [vmem:[%s896 + $0x28] sm:$0xff]
        %v903 = vld [vmem:[%s896 + $0x30] sm:$0xff]
        %v904 = vld [vmem:[%s896 + $0x38] sm:$0xff]
        %v905 = vld [vmem:[%s896 + $0x40] sm:$0xff]
        %v906 = vld [vmem:[%s896 + $0x48] sm:$0xff]
        %v907 = vld [vmem:[%s896 + $0x50] sm:$0xff]
        %v908 = vld [vmem:[%s896 + $0x58] sm:$0xff]
        %v909 = vld [vmem:[%s896 + $0x60] sm:$0xff]
        %v910 = vld [vmem:[%s896 + $0x68] sm:$0xff]
        %v911 = vld [vmem:[%s896 + $0x70] sm:$0xff]
        %v912 = vld [vmem:[%s896 + $0x78] sm:$0xff]
        %v915 = vrot.slane %v878, 1
        %v916 = vrot.slane %v872, 1
        %v917 = vsel %vm378, %v915, %v916
        %v918 = vrot.slane %v879, 1
        %v919 = vsel %vm378, %v916, %v918
        %922 = vmatprep.subr.mxu0 0.0
        %923 = vmatpush1.msra.mxu0 %v897
        %924 = vmatprep.subr.mxu0 0.0
        %925 = vmatpush1.msra.mxu0 %v898
        %926 = vmatprep.subr.mxu0 0.0
        %927 = vmatpush1.msra.mxu0 %v899
        %928 = vmatprep.subr.mxu0 0.0
        %929 = vmatpush1.msra.mxu0 %v900
        %930 = vmatprep.subr.mxu0 0.0
        %931 = vmatpush1.msra.mxu0 %v901
        %932 = vmatprep.subr.mxu0 0.0
        %933 = vmatpush1.msra.mxu0 %v902
        %934 = vmatprep.subr.mxu0 0.0
        %935 = vmatpush1.msra.mxu0 %v903
        %936 = vmatprep.subr.mxu0 0.0
        %937 = vmatpush1.msra.mxu0 %v904
        %938 = vmatprep.subr.mxu0 0.0
        %939 = vmatpush1.msra.mxu0 %v905
        %940 = vmatprep.subr.mxu0 0.0
        %941 = vmatpush1.msra.mxu0 %v906
        %942 = vmatprep.subr.mxu0 0.0
        %943 = vmatpush1.msra.mxu0 %v907
        %944 = vmatprep.subr.mxu0 0.0
        %945 = vmatpush1.msra.mxu0 %v908
        %946 = vmatprep.subr.mxu0 0.0
        %947 = vmatpush1.msra.mxu0 %v909
        %948 = vmatprep.subr.mxu0 0.0
        %949 = vmatpush1.msra.mxu0 %v910
        %950 = vmatprep.subr.mxu0 0.0
        %951 = vmatpush1.msra.mxu0 %v911
        %952 = vmatprep.subr.mxu0 0.0
        %953 = vmatpush1.msra.mxu0 %v912
        %954 = vmatprep.subr.mxu0 0.0
        %955 = vmatpush1.msra.mxu0 0.0
        %956 = vmatprep.subr.mxu0 0.0
        %957 = vmatpush1.msra.mxu0 0.0
        %958 = vmatprep.subr.mxu0 0.0
        %959 = vmatpush1.msra.mxu0 0.0
        %960 = vmatprep.subr.mxu0 0.0
        %961 = vmatpush1.msra.mxu0 0.0
        %962 = vmatprep.subr.mxu0 0.0
        %963 = vmatpush1.msra.mxu0 0.0
        %964 = vmatprep.subr.mxu0 0.0
        %965 = vmatpush1.msra.mxu0 0.0
        %966 = vmatprep.subr.mxu0 0.0
        %967 = vmatpush1.msra.mxu0 0.0
        %968 = vmatprep.subr.mxu0 0.0
        %969 = vmatpush1.msra.mxu0 0.0
        %970 = vmatprep.subr.mxu0 0.0
        %971 = vmatpush1.msra.mxu0 0.0
        %972 = vmatprep.subr.mxu0 0.0
        %973 = vmatpush1.msra.mxu0 0.0
        %974 = vmatprep.subr.mxu0 0.0
        %975 = vmatpush1.msra.mxu0 0.0
        %976 = vmatprep.subr.mxu0 0.0
        %977 = vmatpush1.msra.mxu0 0.0
        %978 = vmatprep.subr.mxu0 0.0
        %979 = vmatpush1.msra.mxu0 0.0
        %980 = vmatprep.subr.mxu0 0.0
        %981 = vmatpush1.msra.mxu0 0.0
        %982 = vmatprep.subr.mxu0 0.0
        %983 = vmatpush1.msra.mxu0 0.0
        %984 = vmatprep.subr.mxu0 0.0
        %985 = vmatpush1.msra.mxu0 0.0
        %986 = vmatprep.mubr.f32.mxu0 0.0
        %987 = vmatmul.mubr.f32.gmra.mrb[0].mxu0 %v917
        %v988 = vpop.f32.mrb[0].mxu0
        %v989 = vadd.f32 0.0, %v988
        %v990 = vpop.f32.mrb[0].mxu0
        %991 = vmatprep.mubr.f32.mxu0 0.0
        %992 = vmatmul.mubr.f32.gmra.mrb[0].mxu0 %v919
        %v993 = vpop.f32.mrb[0].mxu0
        %v994 = vadd.f32 0.0, %v993
        %v995 = vpop.f32.mrb[0].mxu0
        %996 = vdwg.mxu0
        %997 = vmatprep.subr.mxu0 0.0
        %998 = vmatpush1.msra.mxu0 %v880
        %999 = vmatprep.subr.mxu0 0.0
        %1000 = vmatpush1.msra.mxu0 %v881
        %1001 = vmatprep.subr.mxu0 0.0
        %1002 = vmatpush1.msra.mxu0 %v882
        %1003 = vmatprep.subr.mxu0 0.0
        %1004 = vmatpush1.msra.mxu0 %v883
        %1005 = vmatprep.subr.mxu0 0.0
        %1006 = vmatpush1.msra.mxu0 %v884
        %1007 = vmatprep.subr.mxu0 0.0
        %1008 = vmatpush1.msra.mxu0 %v885
        %1009 = vmatprep.subr.mxu0 0.0
        %1010 = vmatpush1.msra.mxu0 %v886
        %1011 = vmatprep.subr.mxu0 0.0
        %1012 = vmatpush1.msra.mxu0 %v887
        %1013 = vmatprep.subr.mxu0 0.0
        %1014 = vmatpush1.msra.mxu0 %v888
        %1015 = vmatprep.subr.mxu0 0.0
        %1016 = vmatpush1.msra.mxu0 %v889
        %1017 = vmatprep.subr.mxu0 0.0
        %1018 = vmatpush1.msra.mxu0 %v890
        %1019 = vmatprep.subr.mxu0 0.0
        %1020 = vmatpush1.msra.mxu0 %v891
        %1021 = vmatprep.subr.mxu0 0.0
        %1022 = vmatpush1.msra.mxu0 %v892
        %1023 = vmatprep.subr.mxu0 0.0
        %1024 = vmatpush1.msra.mxu0 %v893
        %1025 = vmatprep.subr.mxu0 0.0
        %1026 = vmatpush1.msra.mxu0 %v894
        %1027 = vmatprep.subr.mxu0 0.0
        %1028 = vmatpush1.msra.mxu0 %v895
        %1029 = vmatprep.subr.mxu0 0.0
        %1030 = vmatpush1.msra.mxu0 0.0
        %1031 = vmatprep.subr.mxu0 0.0
        %1032 = vmatpush1.msra.mxu0 0.0
        %1033 = vmatprep.subr.mxu0 0.0
        %1034 = vmatpush1.msra.mxu0 0.0
        %1035 = vmatprep.subr.mxu0 0.0
        %1036 = vmatpush1.msra.mxu0 0.0
        %1037 = vmatprep.subr.mxu0 0.0
        %1038 = vmatpush1.msra.mxu0 0.0
        %1039 = vmatprep.subr.mxu0 0.0
        %1040 = vmatpush1.msra.mxu0 0.0
        %1041 = vmatprep.subr.mxu0 0.0
        %1042 = vmatpush1.msra.mxu0 0.0
        %1043 = vmatprep.subr.mxu0 0.0
        %1044 = vmatpush1.msra.mxu0 0.0
        %1045 = vmatprep.subr.mxu0 0.0
        %1046 = vmatpush1.msra.mxu0 0.0
        %1047 = vmatprep.subr.mxu0 0.0
        %1048 = vmatpush1.msra.mxu0 0.0
        %1049 = vmatprep.subr.mxu0 0.0
        %1050 = vmatpush1.msra.mxu0 0.0
        %1051 = vmatprep.subr.mxu0 0.0
        %1052 = vmatpush1.msra.mxu0 0.0
        %1053 = vmatprep.subr.mxu0 0.0
        %1054 = vmatpush1.msra.mxu0 0.0
        %1055 = vmatprep.subr.mxu0 0.0
        %1056 = vmatpush1.msra.mxu0 0.0
        %1057 = vmatprep.subr.mxu0 0.0
        %1058 = vmatpush1.msra.mxu0 0.0
        %1059 = vmatprep.subr.mxu0 0.0
        %1060 = vmatpush1.msra.mxu0 0.0
        %1061 = vmatprep.mubr.f32.mxu0 0.0
        %1062 = vmatmul.mubr.f32.gmra.mrb[0].mxu0 %v878
        %v1063 = vpop.f32.mrb[0].mxu0
        %v1064 = vadd.f32 %v989, %v1063
        %v1065 = vpop.f32.mrb[0].mxu0
        %1066 = vmatprep.mubr.f32.mxu0 0.0
        %1067 = vmatmul.mubr.f32.gmra.mrb[0].mxu0 %v872
        %v1068 = vpop.f32.mrb[0].mxu0
        %v1069 = vadd.f32 %v994, %v1068
        %v1070 = vpop.f32.mrb[0].mxu0
        %1071 = vdwg.mxu0
        %s1072 = scalar_lea.vmem %s2, 256
        %v1073 = vld [vmem:[%s1072] sm:$0xff]
        %v1074 = vld [vmem:[%s1072 + $0x8] sm:$0xff]
        %v1075 = vld [vmem:[%s1072 + $0x10] sm:$0xff]
        %v1076 = vld [vmem:[%s1072 + $0x18] sm:$0xff]
        %v1077 = vld [vmem:[%s1072 + $0x20] sm:$0xff]
        %v1078 = vld [vmem:[%s1072 + $0x28] sm:$0xff]
        %v1079 = vld [vmem:[%s1072 + $0x30] sm:$0xff]
        %v1080 = vld [vmem:[%s1072 + $0x38] sm:$0xff]
        %v1081 = vld [vmem:[%s1072 + $0x40] sm:$0xff]
        %v1082 = vld [vmem:[%s1072 + $0x48] sm:$0xff]
        %v1083 = vld [vmem:[%s1072 + $0x50] sm:$0xff]
        %v1084 = vld [vmem:[%s1072 + $0x58] sm:$0xff]
        %v1085 = vld [vmem:[%s1072 + $0x60] sm:$0xff]
        %v1086 = vld [vmem:[%s1072 + $0x68] sm:$0xff]
        %v1087 = vld [vmem:[%s1072 + $0x70] sm:$0xff]
        %v1088 = vld [vmem:[%s1072 + $0x78] sm:$0xff]
        %v1089 = vrot.slane %v878, 2
        %v1090 = vrot.slane %v872, 2
        %v1091 = vsel %vm553, %v1089, %v1090
        %v1092 = vrot.slane %v879, 2
        %v1093 = vsel %vm553, %v1090, %v1092
        %1096 = vmatprep.subr.mxu0 0.0
        %1097 = vmatpush1.msra.mxu0 %v1073
        %1098 = vmatprep.subr.mxu0 0.0
        %1099 = vmatpush1.msra.mxu0 %v1074
        %1100 = vmatprep.subr.mxu0 0.0
        %1101 = vmatpush1.msra.mxu0 %v1075
        %1102 = vmatprep.subr.mxu0 0.0
        %1103 = vmatpush1.msra.mxu0 %v1076
        %1104 = vmatprep.subr.mxu0 0.0
        %1105 = vmatpush1.msra.mxu0 %v1077
        %1106 = vmatprep.subr.mxu0 0.0
        %1107 = vmatpush1.msra.mxu0 %v1078
        %1108 = vmatprep.subr.mxu0 0.0
        %1109 = vmatpush1.msra.mxu0 %v1079
        %1110 = vmatprep.subr.mxu0 0.0
        %1111 = vmatpush1.msra.mxu0 %v1080
        %1112 = vmatprep.subr.mxu0 0.0
        %1113 = vmatpush1.msra.mxu0 %v1081
        %1114 = vmatprep.subr.mxu0 0.0
        %1115 = vmatpush1.msra.mxu0 %v1082
        %1116 = vmatprep.subr.mxu0 0.0
        %1117 = vmatpush1.msra.mxu0 %v1083
        %1118 = vmatprep.subr.mxu0 0.0
        %1119 = vmatpush1.msra.mxu0 %v1084
        %1120 = vmatprep.subr.mxu0 0.0
        %1121 = vmatpush1.msra.mxu0 %v1085
        %1122 = vmatprep.subr.mxu0 0.0
        %1123 = vmatpush1.msra.mxu0 %v1086
        %1124 = vmatprep.subr.mxu0 0.0
        %1125 = vmatpush1.msra.mxu0 %v1087
        %1126 = vmatprep.subr.mxu0 0.0
        %1127 = vmatpush1.msra.mxu0 %v1088
        %1128 = vmatprep.subr.mxu0 0.0
        %1129 = vmatpush1.msra.mxu0 0.0
        %1130 = vmatprep.subr.mxu0 0.0
        %1131 = vmatpush1.msra.mxu0 0.0
        %1132 = vmatprep.subr.mxu0 0.0
        %1133 = vmatpush1.msra.mxu0 0.0
        %1134 = vmatprep.subr.mxu0 0.0
        %1135 = vmatpush1.msra.mxu0 0.0
        %1136 = vmatprep.subr.mxu0 0.0
        %1137 = vmatpush1.msra.mxu0 0.0
        %1138 = vmatprep.subr.mxu0 0.0
        %1139 = vmatpush1.msra.mxu0 0.0
        %1140 = vmatprep.subr.mxu0 0.0
        %1141 = vmatpush1.msra.mxu0 0.0
        %1142 = vmatprep.subr.mxu0 0.0
        %1143 = vmatpush1.msra.mxu0 0.0
        %1144 = vmatprep.subr.mxu0 0.0
        %1145 = vmatpush1.msra.mxu0 0.0
        %1146 = vmatprep.subr.mxu0 0.0
        %1147 = vmatpush1.msra.mxu0 0.0
        %1148 = vmatprep.subr.mxu0 0.0
        %1149 = vmatpush1.msra.mxu0 0.0
        %1150 = vmatprep.subr.mxu0 0.0
        %1151 = vmatpush1.msra.mxu0 0.0
        %1152 = vmatprep.subr.mxu0 0.0
        %1153 = vmatpush1.msra.mxu0 0.0
        %1154 = vmatprep.subr.mxu0 0.0
        %1155 = vmatpush1.msra.mxu0 0.0
        %1156 = vmatprep.subr.mxu0 0.0
        %1157 = vmatpush1.msra.mxu0 0.0
        %1158 = vmatprep.subr.mxu0 0.0
        %1159 = vmatpush1.msra.mxu0 0.0
        %1160 = vmatprep.mubr.f32.mxu0 0.0
        %1161 = vmatmul.mubr.f32.gmra.mrb[0].mxu0 %v1091
        %v1162 = vpop.f32.mrb[0].mxu0
        %v1163 = vadd.f32 0.0, %v1162
        %v1164 = vpop.f32.mrb[0].mxu0
        %1165 = vmatprep.mubr.f32.mxu0 0.0
        %1166 = vmatmul.mubr.f32.gmra.mrb[0].mxu0 %v1093
        %v1167 = vpop.f32.mrb[0].mxu0
        %v1168 = vadd.f32 0.0, %v1167
        %v1169 = vpop.f32.mrb[0].mxu0
        %1170 = vdwg.mxu0
        %v1171 = vadd.f32 %v1064, %v1163
        %v1172 = vadd.f32 %v1069, %v1168
        %v1173 = vlaneseq
        %v1174 = vshrl.u32 %v1173, 7
        %v1175 = vsub.s32 0, %v1174
        %v1176 = vrot.slane %v272, %v1175
        %v1177 = vadd.f32 %v1171, %v1176
        %v1178 = vadd.f32 %v1172, %v1176
        %v1179 = vmul.f32 %v1177, 0.5
        %v1180 = vmul.f32 %v1178, 0.5
        %v1181 = vmul.f32 %v1177, 0.70710677
        %v1182 = vmul.f32 %v1178, 0.70710677
        %vm1183 = vcmp.ge.f32.partialorder %v1181, 0.0
        %vm1184 = vcmp.ge.f32.partialorder %v1182, 0.0
        %v1185 = vsel %vm1183, 1.0, -1.0
        %v1186 = vsel %vm1184, 1.0, -1.0
        %v1187 = vand.u32 2147483647, %v1181
        %v1188 = vand.u32 2147483647, %v1182
        %v1189 = vmul.f32 %v1187, 0.3275911
        %v1190 = vmul.f32 %v1188, 0.3275911
        %v1191 = vadd.f32 %v1189, 1.0
        %v1192 = vadd.f32 %v1190, 1.0
        %v1193 = vrcp.pop %v1191
        %v1194 = vrcp.pop %v1192
        %v1195 = vmul.f32 %v1193, 1.0614054
        %v1196 = vmul.f32 %v1194, 1.0614054
        %v1197 = vadd.f32 %v1195, -1.4531521
        %v1198 = vadd.f32 %v1196, -1.4531521
        %v1199 = vmul.f32 %v1197, %v1193
        %v1200 = vmul.f32 %v1198, %v1194
        %v1201 = vadd.f32 %v1199, 1.4214138
        %v1202 = vadd.f32 %v1200, 1.4214138
        %v1203 = vmul.f32 %v1201, %v1193
        %v1204 = vmul.f32 %v1202, %v1194
        %v1205 = vadd.f32 %v1203, -0.28449672
        %v1206 = vadd.f32 %v1204, -0.28449672
        %v1207 = vmul.f32 %v1205, %v1193
        %v1208 = vmul.f32 %v1206, %v1194
        %v1209 = vadd.f32 %v1207, 0.2548296
        %v1210 = vadd.f32 %v1208, 0.2548296
        %v1211 = vmul.f32 %v1209, %v1193
        %v1212 = vmul.f32 %v1210, %v1194
        %v1213 = vsub.f32 0.0, %v1187
        %v1214 = vsub.f32 0.0, %v1188
        %v1215 = vmul.f32 %v1213, %v1187
        %v1216 = vmul.f32 %v1214, %v1188
        %v1217 = vmul.f32 %v1215, 1.442695
        %v1218 = vpow.pop %v1217
        %v1219 = vmul.f32 %v1216, 1.442695
        %v1220 = vpow.pop %v1219
        %v1221 = vmul.f32 %v1211, %v1218
        %v1222 = vmul.f32 %v1212, %v1220
        %v1223 = vsub.f32 1.0, %v1221
        %v1224 = vsub.f32 1.0, %v1222
        %v1225 = vmul.f32 %v1185, %v1223
        %v1226 = vmul.f32 %v1186, %v1224
        %v1227 = vadd.f32 %v1225, 1.0
        %v1228 = vadd.f32 %v1226, 1.0
        %v1229 = vmul.f32 %v1179, %v1227
        %v1230 = vmul.f32 %v1180, %v1228
        %1231 = vmatprep.subr.mxu0 0.0
        %1232 = vmatpush1.msra.mxu0 %v278
        %1233 = vmatprep.subr.mxu0 0.0
        %1234 = vmatpush1.msra.mxu0 %v279
        %1235 = vmatprep.subr.mxu0 0.0
        %1236 = vmatpush1.msra.mxu0 %v280
        %1237 = vmatprep.subr.mxu0 0.0
        %1238 = vmatpush1.msra.mxu0 %v281
        %1239 = vmatprep.subr.mxu0 0.0
        %1240 = vmatpush1.msra.mxu0 %v282
        %1241 = vmatprep.subr.mxu0 0.0
        %1242 = vmatpush1.msra.mxu0 %v283
        %1243 = vmatprep.subr.mxu0 0.0
        %1244 = vmatpush1.msra.mxu0 %v284
        %1245 = vmatprep.subr.mxu0 0.0
        %1246 = vmatpush1.msra.mxu0 %v285
        %1247 = vmatprep.subr.mxu0 0.0
        %1248 = vmatpush1.msra.mxu0 %v286
        %1249 = vmatprep.subr.mxu0 0.0
        %1250 = vmatpush1.msra.mxu0 %v287
        %1251 = vmatprep.subr.mxu0 0.0
        %1252 = vmatpush1.msra.mxu0 %v288
        %1253 = vmatprep.subr.mxu0 0.0
        %1254 = vmatpush1.msra.mxu0 %v289
        %1255 = vmatprep.subr.mxu0 0.0
        %1256 = vmatpush1.msra.mxu0 %v290
        %1257 = vmatprep.subr.mxu0 0.0
        %1258 = vmatpush1.msra.mxu0 %v291
        %1259 = vmatprep.subr.mxu0 0.0
        %1260 = vmatpush1.msra.mxu0 %v292
        %1261 = vmatprep.subr.mxu0 0.0
        %1262 = vmatpush1.msra.mxu0 %v293
        %1263 = vmatprep.subr.mxu0 0.0
        %1264 = vmatpush1.msra.mxu0 0.0
        %1265 = vmatprep.subr.mxu0 0.0
        %1266 = vmatpush1.msra.mxu0 0.0
        %1267 = vmatprep.subr.mxu0 0.0
        %1268 = vmatpush1.msra.mxu0 0.0
        %1269 = vmatprep.subr.mxu0 0.0
        %1270 = vmatpush1.msra.mxu0 0.0
        %1271 = vmatprep.subr.mxu0 0.0
        %1272 = vmatpush1.msra.mxu0 0.0
        %1273 = vmatprep.subr.mxu0 0.0
        %1274 = vmatpush1.msra.mxu0 0.0
        %1275 = vmatprep.subr.mxu0 0.0
        %1276 = vmatpush1.msra.mxu0 0.0
        %1277 = vmatprep.subr.mxu0 0.0
        %1278 = vmatpush1.msra.mxu0 0.0
        %1279 = vmatprep.subr.mxu0 0.0
        %1280 = vmatpush1.msra.mxu0 0.0
        %1281 = vmatprep.subr.mxu0 0.0
        %1282 = vmatpush1.msra.mxu0 0.0
        %1283 = vmatprep.subr.mxu0 0.0
        %1284 = vmatpush1.msra.mxu0 0.0
        %1285 = vmatprep.subr.mxu0 0.0
        %1286 = vmatpush1.msra.mxu0 0.0
        %1287 = vmatprep.subr.mxu0 0.0
        %1288 = vmatpush1.msra.mxu0 0.0
        %1289 = vmatprep.subr.mxu0 0.0
        %1290 = vmatpush1.msra.mxu0 0.0
        %1291 = vmatprep.subr.mxu0 0.0
        %1292 = vmatpush1.msra.mxu0 0.0
        %1293 = vmatprep.subr.mxu0 0.0
        %1294 = vmatpush1.msra.mxu0 0.0
        %1295 = vmatprep.mubr.f32.mxu0 0.0
        %1296 = vmatmul.mubr.f32.gmra.mrb[0].mxu0 %v1229
        %v1297 = vpop.f32.mrb[0].mxu0
        %v1298 = vadd.f32 0.0, %v1297
        %v1299 = vpop.f32.mrb[0].mxu0
        %1300 = vmatprep.mubr.f32.mxu0 0.0
        %1301 = vmatmul.mubr.f32.gmra.mrb[0].mxu0 %v1230
        %v1302 = vpop.f32.mrb[0].mxu0
        %v1303 = vadd.f32 0.0, %v1302
        %v1304 = vpop.f32.mrb[0].mxu0
        %1305 = vdwg.mxu0
        %v1306 = vsub.f32 %v1229, %v1298
        %v1307 = vsub.f32 %v1230, %v1303
        %v1308 = vmul.f32 %v1306, %v1306
        %v1309 = vmul.f32 %v1307, %v1307
        %1310 = vmatprep.subr.mxu0 0.0
        %1311 = vmatpush1.msra.mxu0 %v278
        %1312 = vmatprep.subr.mxu0 0.0
        %1313 = vmatpush1.msra.mxu0 %v279
        %1314 = vmatprep.subr.mxu0 0.0
        %1315 = vmatpush1.msra.mxu0 %v280
        %1316 = vmatprep.subr.mxu0 0.0
        %1317 = vmatpush1.msra.mxu0 %v281
        %1318 = vmatprep.subr.mxu0 0.0
        %1319 = vmatpush1.msra.mxu0 %v282
        %1320 = vmatprep.subr.mxu0 0.0
        %1321 = vmatpush1.msra.mxu0 %v283
        %1322 = vmatprep.subr.mxu0 0.0
        %1323 = vmatpush1.msra.mxu0 %v284
        %1324 = vmatprep.subr.mxu0 0.0
        %1325 = vmatpush1.msra.mxu0 %v285
        %1326 = vmatprep.subr.mxu0 0.0
        %1327 = vmatpush1.msra.mxu0 %v286
        %1328 = vmatprep.subr.mxu0 0.0
        %1329 = vmatpush1.msra.mxu0 %v287
        %1330 = vmatprep.subr.mxu0 0.0
        %1331 = vmatpush1.msra.mxu0 %v288
        %1332 = vmatprep.subr.mxu0 0.0
        %1333 = vmatpush1.msra.mxu0 %v289
        %1334 = vmatprep.subr.mxu0 0.0
        %1335 = vmatpush1.msra.mxu0 %v290
        %1336 = vmatprep.subr.mxu0 0.0
        %1337 = vmatpush1.msra.mxu0 %v291
        %1338 = vmatprep.subr.mxu0 0.0
        %1339 = vmatpush1.msra.mxu0 %v292
        %1340 = vmatprep.subr.mxu0 0.0
        %1341 = vmatpush1.msra.mxu0 %v293
        %1342 = vmatprep.subr.mxu0 0.0
        %1343 = vmatpush1.msra.mxu0 0.0
        %1344 = vmatprep.subr.mxu0 0.0
        %1345 = vmatpush1.msra.mxu0 0.0
        %1346 = vmatprep.subr.mxu0 0.0
        %1347 = vmatpush1.msra.mxu0 0.0
        %1348 = vmatprep.subr.mxu0 0.0
        %1349 = vmatpush1.msra.mxu0 0.0
        %1350 = vmatprep.subr.mxu0 0.0
        %1351 = vmatpush1.msra.mxu0 0.0
        %1352 = vmatprep.subr.mxu0 0.0
        %1353 = vmatpush1.msra.mxu0 0.0
        %1354 = vmatprep.subr.mxu0 0.0
        %1355 = vmatpush1.msra.mxu0 0.0
        %1356 = vmatprep.subr.mxu0 0.0
        %1357 = vmatpush1.msra.mxu0 0.0
        %1358 = vmatprep.subr.mxu0 0.0
        %1359 = vmatpush1.msra.mxu0 0.0
        %1360 = vmatprep.subr.mxu0 0.0
        %1361 = vmatpush1.msra.mxu0 0.0
        %1362 = vmatprep.subr.mxu0 0.0
        %1363 = vmatpush1.msra.mxu0 0.0
        %1364 = vmatprep.subr.mxu0 0.0
        %1365 = vmatpush1.msra.mxu0 0.0
        %1366 = vmatprep.subr.mxu0 0.0
        %1367 = vmatpush1.msra.mxu0 0.0
        %1368 = vmatprep.subr.mxu0 0.0
        %1369 = vmatpush1.msra.mxu0 0.0
        %1370 = vmatprep.subr.mxu0 0.0
        %1371 = vmatpush1.msra.mxu0 0.0
        %1372 = vmatprep.subr.mxu0 0.0
        %1373 = vmatpush1.msra.mxu0 0.0
        %1374 = vmatprep.mubr.f32.mxu0 0.0
        %1375 = vmatmul.mubr.f32.gmra.mrb[0].mxu0 %v1308
        %v1376 = vpop.f32.mrb[0].mxu0
        %v1377 = vadd.f32 1e-05, %v1376
        %v1378 = vpop.f32.mrb[0].mxu0
        %1379 = vmatprep.mubr.f32.mxu0 0.0
        %1380 = vmatmul.mubr.f32.gmra.mrb[0].mxu0 %v1309
        %v1381 = vpop.f32.mrb[0].mxu0
        %v1382 = vadd.f32 1e-05, %v1381
        %v1383 = vpop.f32.mrb[0].mxu0
        %1384 = vdwg.mxu0
        %v1385 = vrsqrt.pop %v1377
        %v1386 = vrsqrt.pop %v1382
        %v1387 = vmul.f32 %v1306, %v1385
        %v1388 = vmul.f32 %v1307, %v1386
        %v1389 = vlaneseq
        %v1390 = vshrl.u32 %v1389, 7
        %v1391 = vsub.s32 0, %v1390
        %v1392 = vrot.slane %v273, %v1391
        %v1393 = vmul.f32 %v1387, %v1392
        %v1394 = vmul.f32 %v1388, %v1392
        %v1395 = vlaneseq
        %v1396 = vshrl.u32 %v1395, 7
        %v1397 = vsub.s32 0, %v1396
        %v1398 = vrot.slane %v274, %v1397
        %v1399 = vadd.f32 %v1393, %v1398
        %v1400 = vadd.f32 %v1394, %v1398
        %v1402 = vrot.slane %v1399, 1
        %v1405 = vrot.slane %v1399, 7
        %v1406 = vrot.slane %v1400, 7
        %v1407 = vsel %vm332, %v1405, %v1406
        %v1411 = vrot.slane %v1400, 5
        %v1413 = vsel %vm332, %v1402, %v1405
        %v1414 = vsel %vm332, %v1406, %v1411
        %v1415 = vld [vmem:[%s3] sm:$0xff]
        %v1416 = vld [vmem:[%s3 + $0x8] sm:$0xff]
        %v1417 = vld [vmem:[%s3 + $0x10] sm:$0xff]
        %v1418 = vld [vmem:[%s3 + $0x18] sm:$0xff]
        %v1419 = vld [vmem:[%s3 + $0x20] sm:$0xff]
        %v1420 = vld [vmem:[%s3 + $0x28] sm:$0xff]
        %v1421 = vld [vmem:[%s3 + $0x30] sm:$0xff]
        %v1422 = vld [vmem:[%s3 + $0x38] sm:$0xff]
        %v1423 = vld [vmem:[%s3 + $0x40] sm:$0xff]
        %v1424 = vld [vmem:[%s3 + $0x48] sm:$0xff]
        %v1425 = vld [vmem:[%s3 + $0x50] sm:$0xff]
        %v1426 = vld [vmem:[%s3 + $0x58] sm:$0xff]
        %v1427 = vld [vmem:[%s3 + $0x60] sm:$0xff]
        %v1428 = vld [vmem:[%s3 + $0x68] sm:$0xff]
        %v1429 = vld [vmem:[%s3 + $0x70] sm:$0xff]
        %v1430 = vld [vmem:[%s3 + $0x78] sm:$0xff]
        %s1431 = scalar_lea.vmem %s3, 128
        %v1432 = vld [vmem:[%s1431] sm:$0xff]
        %v1433 = vld [vmem:[%s1431 + $0x8] sm:$0xff]
        %v1434 = vld [vmem:[%s1431 + $0x10] sm:$0xff]
        %v1435 = vld [vmem:[%s1431 + $0x18] sm:$0xff]
        %v1436 = vld [vmem:[%s1431 + $0x20] sm:$0xff]
        %v1437 = vld [vmem:[%s1431 + $0x28] sm:$0xff]
        %v1438 = vld [vmem:[%s1431 + $0x30] sm:$0xff]
        %v1439 = vld [vmem:[%s1431 + $0x38] sm:$0xff]
        %v1440 = vld [vmem:[%s1431 + $0x40] sm:$0xff]
        %v1441 = vld [vmem:[%s1431 + $0x48] sm:$0xff]
        %v1442 = vld [vmem:[%s1431 + $0x50] sm:$0xff]
        %v1443 = vld [vmem:[%s1431 + $0x58] sm:$0xff]
        %v1444 = vld [vmem:[%s1431 + $0x60] sm:$0xff]
        %v1445 = vld [vmem:[%s1431 + $0x68] sm:$0xff]
        %v1446 = vld [vmem:[%s1431 + $0x70] sm:$0xff]
        %v1447 = vld [vmem:[%s1431 + $0x78] sm:$0xff]
        %v1450 = vrot.slane %v1413, 1
        %v1451 = vrot.slane %v1407, 1
        %v1452 = vsel %vm378, %v1450, %v1451
        %v1453 = vrot.slane %v1414, 1
        %v1454 = vsel %vm378, %v1451, %v1453
        %1457 = vmatprep.subr.mxu0 0.0
        %1458 = vmatpush1.msra.mxu0 %v1432
        %1459 = vmatprep.subr.mxu0 0.0
        %1460 = vmatpush1.msra.mxu0 %v1433
        %1461 = vmatprep.subr.mxu0 0.0
        %1462 = vmatpush1.msra.mxu0 %v1434
        %1463 = vmatprep.subr.mxu0 0.0
        %1464 = vmatpush1.msra.mxu0 %v1435
        %1465 = vmatprep.subr.mxu0 0.0
        %1466 = vmatpush1.msra.mxu0 %v1436
        %1467 = vmatprep.subr.mxu0 0.0
        %1468 = vmatpush1.msra.mxu0 %v1437
        %1469 = vmatprep.subr.mxu0 0.0
        %1470 = vmatpush1.msra.mxu0 %v1438
        %1471 = vmatprep.subr.mxu0 0.0
        %1472 = vmatpush1.msra.mxu0 %v1439
        %1473 = vmatprep.subr.mxu0 0.0
        %1474 = vmatpush1.msra.mxu0 %v1440
        %1475 = vmatprep.subr.mxu0 0.0
        %1476 = vmatpush1.msra.mxu0 %v1441
        %1477 = vmatprep.subr.mxu0 0.0
        %1478 = vmatpush1.msra.mxu0 %v1442
        %1479 = vmatprep.subr.mxu0 0.0
        %1480 = vmatpush1.msra.mxu0 %v1443
        %1481 = vmatprep.subr.mxu0 0.0
        %1482 = vmatpush1.msra.mxu0 %v1444
        %1483 = vmatprep.subr.mxu0 0.0
        %1484 = vmatpush1.msra.mxu0 %v1445
        %1485 = vmatprep.subr.mxu0 0.0
        %1486 = vmatpush1.msra.mxu0 %v1446
        %1487 = vmatprep.subr.mxu0 0.0
        %1488 = vmatpush1.msra.mxu0 %v1447
        %1489 = vmatprep.subr.mxu0 0.0
        %1490 = vmatpush1.msra.mxu0 0.0
        %1491 = vmatprep.subr.mxu0 0.0
        %1492 = vmatpush1.msra.mxu0 0.0
        %1493 = vmatprep.subr.mxu0 0.0
        %1494 = vmatpush1.msra.mxu0 0.0
        %1495 = vmatprep.subr.mxu0 0.0
        %1496 = vmatpush1.msra.mxu0 0.0
        %1497 = vmatprep.subr.mxu0 0.0
        %1498 = vmatpush1.msra.mxu0 0.0
        %1499 = vmatprep.subr.mxu0 0.0
        %1500 = vmatpush1.msra.mxu0 0.0
        %1501 = vmatprep.subr.mxu0 0.0
        %1502 = vmatpush1.msra.mxu0 0.0
        %1503 = vmatprep.subr.mxu0 0.0
        %1504 = vmatpush1.msra.mxu0 0.0
        %1505 = vmatprep.subr.mxu0 0.0
        %1506 = vmatpush1.msra.mxu0 0.0
        %1507 = vmatprep.subr.mxu0 0.0
        %1508 = vmatpush1.msra.mxu0 0.0
        %1509 = vmatprep.subr.mxu0 0.0
        %1510 = vmatpush1.msra.mxu0 0.0
        %1511 = vmatprep.subr.mxu0 0.0
        %1512 = vmatpush1.msra.mxu0 0.0
        %1513 = vmatprep.subr.mxu0 0.0
        %1514 = vmatpush1.msra.mxu0 0.0
        %1515 = vmatprep.subr.mxu0 0.0
        %1516 = vmatpush1.msra.mxu0 0.0
        %1517 = vmatprep.subr.mxu0 0.0
        %1518 = vmatpush1.msra.mxu0 0.0
        %1519 = vmatprep.subr.mxu0 0.0
        %1520 = vmatpush1.msra.mxu0 0.0
        %1521 = vmatprep.mubr.f32.mxu0 0.0
        %1522 = vmatmul.mubr.f32.gmra.mrb[0].mxu0 %v1452
        %v1523 = vpop.f32.mrb[0].mxu0
        %v1524 = vadd.f32 0.0, %v1523
        %v1525 = vpop.f32.mrb[0].mxu0
        %1526 = vmatprep.mubr.f32.mxu0 0.0
        %1527 = vmatmul.mubr.f32.gmra.mrb[0].mxu0 %v1454
        %v1528 = vpop.f32.mrb[0].mxu0
        %v1529 = vadd.f32 0.0, %v1528
        %v1530 = vpop.f32.mrb[0].mxu0
        %1531 = vdwg.mxu0
        %1532 = vmatprep.subr.mxu0 0.0
        %1533 = vmatpush1.msra.mxu0 %v1415
        %1534 = vmatprep.subr.mxu0 0.0
        %1535 = vmatpush1.msra.mxu0 %v1416
        %1536 = vmatprep.subr.mxu0 0.0
        %1537 = vmatpush1.msra.mxu0 %v1417
        %1538 = vmatprep.subr.mxu0 0.0
        %1539 = vmatpush1.msra.mxu0 %v1418
        %1540 = vmatprep.subr.mxu0 0.0
        %1541 = vmatpush1.msra.mxu0 %v1419
        %1542 = vmatprep.subr.mxu0 0.0
        %1543 = vmatpush1.msra.mxu0 %v1420
        %1544 = vmatprep.subr.mxu0 0.0
        %1545 = vmatpush1.msra.mxu0 %v1421
        %1546 = vmatprep.subr.mxu0 0.0
        %1547 = vmatpush1.msra.mxu0 %v1422
        %1548 = vmatprep.subr.mxu0 0.0
        %1549 = vmatpush1.msra.mxu0 %v1423
        %1550 = vmatprep.subr.mxu0 0.0
        %1551 = vmatpush1.msra.mxu0 %v1424
        %1552 = vmatprep.subr.mxu0 0.0
        %1553 = vmatpush1.msra.mxu0 %v1425
        %1554 = vmatprep.subr.mxu0 0.0
        %1555 = vmatpush1.msra.mxu0 %v1426
        %1556 = vmatprep.subr.mxu0 0.0
        %1557 = vmatpush1.msra.mxu0 %v1427
        %1558 = vmatprep.subr.mxu0 0.0
        %1559 = vmatpush1.msra.mxu0 %v1428
        %1560 = vmatprep.subr.mxu0 0.0
        %1561 = vmatpush1.msra.mxu0 %v1429
        %1562 = vmatprep.subr.mxu0 0.0
        %1563 = vmatpush1.msra.mxu0 %v1430
        %1564 = vmatprep.subr.mxu0 0.0
        %1565 = vmatpush1.msra.mxu0 0.0
        %1566 = vmatprep.subr.mxu0 0.0
        %1567 = vmatpush1.msra.mxu0 0.0
        %1568 = vmatprep.subr.mxu0 0.0
        %1569 = vmatpush1.msra.mxu0 0.0
        %1570 = vmatprep.subr.mxu0 0.0
        %1571 = vmatpush1.msra.mxu0 0.0
        %1572 = vmatprep.subr.mxu0 0.0
        %1573 = vmatpush1.msra.mxu0 0.0
        %1574 = vmatprep.subr.mxu0 0.0
        %1575 = vmatpush1.msra.mxu0 0.0
        %1576 = vmatprep.subr.mxu0 0.0
        %1577 = vmatpush1.msra.mxu0 0.0
        %1578 = vmatprep.subr.mxu0 0.0
        %1579 = vmatpush1.msra.mxu0 0.0
        %1580 = vmatprep.subr.mxu0 0.0
        %1581 = vmatpush1.msra.mxu0 0.0
        %1582 = vmatprep.subr.mxu0 0.0
        %1583 = vmatpush1.msra.mxu0 0.0
        %1584 = vmatprep.subr.mxu0 0.0
        %1585 = vmatpush1.msra.mxu0 0.0
        %1586 = vmatprep.subr.mxu0 0.0
        %1587 = vmatpush1.msra.mxu0 0.0
        %1588 = vmatprep.subr.mxu0 0.0
        %1589 = vmatpush1.msra.mxu0 0.0
        %1590 = vmatprep.subr.mxu0 0.0
        %1591 = vmatpush1.msra.mxu0 0.0
        %1592 = vmatprep.subr.mxu0 0.0
        %1593 = vmatpush1.msra.mxu0 0.0
        %1594 = vmatprep.subr.mxu0 0.0
        %1595 = vmatpush1.msra.mxu0 0.0
        %1596 = vmatprep.mubr.f32.mxu0 0.0
        %1597 = vmatmul.mubr.f32.gmra.mrb[0].mxu0 %v1413
        %v1598 = vpop.f32.mrb[0].mxu0
        %v1599 = vadd.f32 %v1524, %v1598
        %v1600 = vpop.f32.mrb[0].mxu0
        %1601 = vmatprep.mubr.f32.mxu0 0.0
        %1602 = vmatmul.mubr.f32.gmra.mrb[0].mxu0 %v1407
        %v1603 = vpop.f32.mrb[0].mxu0
        %v1604 = vadd.f32 %v1529, %v1603
        %v1605 = vpop.f32.mrb[0].mxu0
        %1606 = vdwg.mxu0
        %s1607 = scalar_lea.vmem %s3, 256
        %v1608 = vld [vmem:[%s1607] sm:$0xff]
        %v1609 = vld [vmem:[%s1607 + $0x8] sm:$0xff]
        %v1610 = vld [vmem:[%s1607 + $0x10] sm:$0xff]
        %v1611 = vld [vmem:[%s1607 + $0x18] sm:$0xff]
        %v1612 = vld [vmem:[%s1607 + $0x20] sm:$0xff]
        %v1613 = vld [vmem:[%s1607 + $0x28] sm:$0xff]
        %v1614 = vld [vmem:[%s1607 + $0x30] sm:$0xff]
        %v1615 = vld [vmem:[%s1607 + $0x38] sm:$0xff]
        %v1616 = vld [vmem:[%s1607 + $0x40] sm:$0xff]
        %v1617 = vld [vmem:[%s1607 + $0x48] sm:$0xff]
        %v1618 = vld [vmem:[%s1607 + $0x50] sm:$0xff]
        %v1619 = vld [vmem:[%s1607 + $0x58] sm:$0xff]
        %v1620 = vld [vmem:[%s1607 + $0x60] sm:$0xff]
        %v1621 = vld [vmem:[%s1607 + $0x68] sm:$0xff]
        %v1622 = vld [vmem:[%s1607 + $0x70] sm:$0xff]
        %v1623 = vld [vmem:[%s1607 + $0x78] sm:$0xff]
        %v1624 = vrot.slane %v1413, 2
        %v1625 = vrot.slane %v1407, 2
        %v1626 = vsel %vm553, %v1624, %v1625
        %v1627 = vrot.slane %v1414, 2
        %v1628 = vsel %vm553, %v1625, %v1627
        %1631 = vmatprep.subr.mxu0 0.0
        %1632 = vmatpush1.msra.mxu0 %v1608
        %1633 = vmatprep.subr.mxu0 0.0
        %1634 = vmatpush1.msra.mxu0 %v1609
        %1635 = vmatprep.subr.mxu0 0.0
        %1636 = vmatpush1.msra.mxu0 %v1610
        %1637 = vmatprep.subr.mxu0 0.0
        %1638 = vmatpush1.msra.mxu0 %v1611
        %1639 = vmatprep.subr.mxu0 0.0
        %1640 = vmatpush1.msra.mxu0 %v1612
        %1641 = vmatprep.subr.mxu0 0.0
        %1642 = vmatpush1.msra.mxu0 %v1613
        %1643 = vmatprep.subr.mxu0 0.0
        %1644 = vmatpush1.msra.mxu0 %v1614
        %1645 = vmatprep.subr.mxu0 0.0
        %1646 = vmatpush1.msra.mxu0 %v1615
        %1647 = vmatprep.subr.mxu0 0.0
        %1648 = vmatpush1.msra.mxu0 %v1616
        %1649 = vmatprep.subr.mxu0 0.0
        %1650 = vmatpush1.msra.mxu0 %v1617
        %1651 = vmatprep.subr.mxu0 0.0
        %1652 = vmatpush1.msra.mxu0 %v1618
        %1653 = vmatprep.subr.mxu0 0.0
        %1654 = vmatpush1.msra.mxu0 %v1619
        %1655 = vmatprep.subr.mxu0 0.0
        %1656 = vmatpush1.msra.mxu0 %v1620
        %1657 = vmatprep.subr.mxu0 0.0
        %1658 = vmatpush1.msra.mxu0 %v1621
        %1659 = vmatprep.subr.mxu0 0.0
        %1660 = vmatpush1.msra.mxu0 %v1622
        %1661 = vmatprep.subr.mxu0 0.0
        %1662 = vmatpush1.msra.mxu0 %v1623
        %1663 = vmatprep.subr.mxu0 0.0
        %1664 = vmatpush1.msra.mxu0 0.0
        %1665 = vmatprep.subr.mxu0 0.0
        %1666 = vmatpush1.msra.mxu0 0.0
        %1667 = vmatprep.subr.mxu0 0.0
        %1668 = vmatpush1.msra.mxu0 0.0
        %1669 = vmatprep.subr.mxu0 0.0
        %1670 = vmatpush1.msra.mxu0 0.0
        %1671 = vmatprep.subr.mxu0 0.0
        %1672 = vmatpush1.msra.mxu0 0.0
        %1673 = vmatprep.subr.mxu0 0.0
        %1674 = vmatpush1.msra.mxu0 0.0
        %1675 = vmatprep.subr.mxu0 0.0
        %1676 = vmatpush1.msra.mxu0 0.0
        %1677 = vmatprep.subr.mxu0 0.0
        %1678 = vmatpush1.msra.mxu0 0.0
        %1679 = vmatprep.subr.mxu0 0.0
        %1680 = vmatpush1.msra.mxu0 0.0
        %1681 = vmatprep.subr.mxu0 0.0
        %1682 = vmatpush1.msra.mxu0 0.0
        %1683 = vmatprep.subr.mxu0 0.0
        %1684 = vmatpush1.msra.mxu0 0.0
        %1685 = vmatprep.subr.mxu0 0.0
        %1686 = vmatpush1.msra.mxu0 0.0
        %1687 = vmatprep.subr.mxu0 0.0
        %1688 = vmatpush1.msra.mxu0 0.0
        %1689 = vmatprep.subr.mxu0 0.0
        %1690 = vmatpush1.msra.mxu0 0.0
        %1691 = vmatprep.subr.mxu0 0.0
        %1692 = vmatpush1.msra.mxu0 0.0
        %1693 = vmatprep.subr.mxu0 0.0
        %1694 = vmatpush1.msra.mxu0 0.0
        %1695 = vmatprep.mubr.f32.mxu0 0.0
        %1696 = vmatmul.mubr.f32.gmra.mrb[0].mxu0 %v1626
        %v1697 = vpop.f32.mrb[0].mxu0
        %v1698 = vadd.f32 0.0, %v1697
        %v1699 = vpop.f32.mrb[0].mxu0
        %1700 = vmatprep.mubr.f32.mxu0 0.0
        %1701 = vmatmul.mubr.f32.gmra.mrb[0].mxu0 %v1628
        %v1702 = vpop.f32.mrb[0].mxu0
        %v1703 = vadd.f32 0.0, %v1702
        %v1704 = vpop.f32.mrb[0].mxu0
        %1705 = vdwg.mxu0
        %v1706 = vadd.f32 %v1599, %v1698
        %v1707 = vadd.f32 %v1604, %v1703
        %v1708 = vlaneseq
        %v1709 = vshrl.u32 %v1708, 7
        %v1710 = vsub.s32 0, %v1709
        %v1711 = vrot.slane %v275, %v1710
        %v1712 = vadd.f32 %v1706, %v1711
        %v1713 = vadd.f32 %v1707, %v1711
        %v1714 = vadd.f32 %v1712, %v1713
        %v1715 = vrot.slane %v1714, 4
        %v1716 = vadd.f32 %v1714, %v1715
        %v1717 = vrot.slane %v1716, 2
        %v1718 = vadd.f32 %v1716, %v1717
        %v1719 = vrot.slane %v1718, 1
        %v1720 = vadd.f32 %v1718, %v1719
        %v1721 = vmul.f32 %v1720, 0.0625
        %1722 = vmatprep.subr.mxu0 0.0
        %1723 = vmatpush1.msra.mxu0 %v295
        %1724 = vmatprep.subr.mxu0 0.0
        %1725 = vmatpush1.msra.mxu0 %v296
        %1726 = vmatprep.subr.mxu0 0.0
        %1727 = vmatpush1.msra.mxu0 %v297
        %1728 = vmatprep.subr.mxu0 0.0
        %1729 = vmatpush1.msra.mxu0 %v298
        %1730 = vmatprep.subr.mxu0 0.0
        %1731 = vmatpush1.msra.mxu0 %v299
        %1732 = vmatprep.subr.mxu0 0.0
        %1733 = vmatpush1.msra.mxu0 %v300
        %1734 = vmatprep.subr.mxu0 0.0
        %1735 = vmatpush1.msra.mxu0 %v301
        %1736 = vmatprep.subr.mxu0 0.0
        %1737 = vmatpush1.msra.mxu0 %v302
        %1738 = vmatprep.subr.mxu0 0.0
        %1739 = vmatpush1.msra.mxu0 %v303
        %1740 = vmatprep.subr.mxu0 0.0
        %1741 = vmatpush1.msra.mxu0 %v304
        %1742 = vmatprep.subr.mxu0 0.0
        %1743 = vmatpush1.msra.mxu0 %v305
        %1744 = vmatprep.subr.mxu0 0.0
        %1745 = vmatpush1.msra.mxu0 %v306
        %1746 = vmatprep.subr.mxu0 0.0
        %1747 = vmatpush1.msra.mxu0 %v307
        %1748 = vmatprep.subr.mxu0 0.0
        %1749 = vmatpush1.msra.mxu0 %v308
        %1750 = vmatprep.subr.mxu0 0.0
        %1751 = vmatpush1.msra.mxu0 %v309
        %1752 = vmatprep.subr.mxu0 0.0
        %1753 = vmatpush1.msra.mxu0 %v310
        %1754 = vmatprep.subr.mxu0 0.0
        %1755 = vmatpush1.msra.mxu0 0.0
        %1756 = vmatprep.subr.mxu0 0.0
        %1757 = vmatpush1.msra.mxu0 0.0
        %1758 = vmatprep.subr.mxu0 0.0
        %1759 = vmatpush1.msra.mxu0 0.0
        %1760 = vmatprep.subr.mxu0 0.0
        %1761 = vmatpush1.msra.mxu0 0.0
        %1762 = vmatprep.subr.mxu0 0.0
        %1763 = vmatpush1.msra.mxu0 0.0
        %1764 = vmatprep.subr.mxu0 0.0
        %1765 = vmatpush1.msra.mxu0 0.0
        %1766 = vmatprep.subr.mxu0 0.0
        %1767 = vmatpush1.msra.mxu0 0.0
        %1768 = vmatprep.subr.mxu0 0.0
        %1769 = vmatpush1.msra.mxu0 0.0
        %1770 = vmatprep.subr.mxu0 0.0
        %1771 = vmatpush1.msra.mxu0 0.0
        %1772 = vmatprep.subr.mxu0 0.0
        %1773 = vmatpush1.msra.mxu0 0.0
        %1774 = vmatprep.subr.mxu0 0.0
        %1775 = vmatpush1.msra.mxu0 0.0
        %1776 = vmatprep.subr.mxu0 0.0
        %1777 = vmatpush1.msra.mxu0 0.0
        %1778 = vmatprep.subr.mxu0 0.0
        %1779 = vmatpush1.msra.mxu0 0.0
        %1780 = vmatprep.subr.mxu0 0.0
        %1781 = vmatpush1.msra.mxu0 0.0
        %1782 = vmatprep.subr.mxu0 0.0
        %1783 = vmatpush1.msra.mxu0 0.0
        %1784 = vmatprep.subr.mxu0 0.0
        %1785 = vmatpush1.msra.mxu0 0.0
        %1786 = vmatprep.mubr.f32.mxu0 0.0
        %1787 = vmatmul.mubr.f32.gmra.mrb[0].mxu0 %v1721
        %v1788 = vpop.f32.mrb[0].mxu0
        %v1789 = vadd.f32 %v276, %v1788
        %v1790 = vpop.f32.mrb[0].mxu0
        %1791 = vdwg.mxu0
        %v1792 = vmax.f32 %v1789, 0.0
        %1793 = vmatprep.subr.mxu0 0.0
        %1794 = vmatpush1.msra.mxu0 %v312
        %1795 = vmatprep.subr.mxu0 0.0
        %1796 = vmatpush1.msra.mxu0 %v313
        %1797 = vmatprep.subr.mxu0 0.0
        %1798 = vmatpush1.msra.mxu0 %v314
        %1799 = vmatprep.subr.mxu0 0.0
        %1800 = vmatpush1.msra.mxu0 %v315
        %1801 = vmatprep.subr.mxu0 0.0
        %1802 = vmatpush1.msra.mxu0 %v316
        %1803 = vmatprep.subr.mxu0 0.0
        %1804 = vmatpush1.msra.mxu0 %v317
        %1805 = vmatprep.subr.mxu0 0.0
        %1806 = vmatpush1.msra.mxu0 %v318
        %1807 = vmatprep.subr.mxu0 0.0
        %1808 = vmatpush1.msra.mxu0 %v319
        %1809 = vmatprep.subr.mxu0 0.0
        %1810 = vmatpush1.msra.mxu0 %v320
        %1811 = vmatprep.subr.mxu0 0.0
        %1812 = vmatpush1.msra.mxu0 %v321
        %1813 = vmatprep.subr.mxu0 0.0
        %1814 = vmatpush1.msra.mxu0 %v322
        %1815 = vmatprep.subr.mxu0 0.0
        %1816 = vmatpush1.msra.mxu0 %v323
        %1817 = vmatprep.subr.mxu0 0.0
        %1818 = vmatpush1.msra.mxu0 %v324
        %1819 = vmatprep.subr.mxu0 0.0
        %1820 = vmatpush1.msra.mxu0 %v325
        %1821 = vmatprep.subr.mxu0 0.0
        %1822 = vmatpush1.msra.mxu0 %v326
        %1823 = vmatprep.subr.mxu0 0.0
        %1824 = vmatpush1.msra.mxu0 %v327
        %1825 = vmatprep.subr.mxu0 0.0
        %1826 = vmatpush1.msra.mxu0 0.0
        %1827 = vmatprep.subr.mxu0 0.0
        %1828 = vmatpush1.msra.mxu0 0.0
        %1829 = vmatprep.subr.mxu0 0.0
        %1830 = vmatpush1.msra.mxu0 0.0
        %1831 = vmatprep.subr.mxu0 0.0
        %1832 = vmatpush1.msra.mxu0 0.0
        %1833 = vmatprep.subr.mxu0 0.0
        %1834 = vmatpush1.msra.mxu0 0.0
        %1835 = vmatprep.subr.mxu0 0.0
        %1836 = vmatpush1.msra.mxu0 0.0
        %1837 = vmatprep.subr.mxu0 0.0
        %1838 = vmatpush1.msra.mxu0 0.0
        %1839 = vmatprep.subr.mxu0 0.0
        %1840 = vmatpush1.msra.mxu0 0.0
        %1841 = vmatprep.subr.mxu0 0.0
        %1842 = vmatpush1.msra.mxu0 0.0
        %1843 = vmatprep.subr.mxu0 0.0
        %1844 = vmatpush1.msra.mxu0 0.0
        %1845 = vmatprep.subr.mxu0 0.0
        %1846 = vmatpush1.msra.mxu0 0.0
        %1847 = vmatprep.subr.mxu0 0.0
        %1848 = vmatpush1.msra.mxu0 0.0
        %1849 = vmatprep.subr.mxu0 0.0
        %1850 = vmatpush1.msra.mxu0 0.0
        %1851 = vmatprep.subr.mxu0 0.0
        %1852 = vmatpush1.msra.mxu0 0.0
        %1853 = vmatprep.subr.mxu0 0.0
        %1854 = vmatpush1.msra.mxu0 0.0
        %1855 = vmatprep.subr.mxu0 0.0
        %1856 = vmatpush1.msra.mxu0 0.0
        %1857 = vmatprep.mubr.f32.mxu0 0.0
        %1858 = vmatmul.mubr.f32.gmra.mrb[0].mxu0 %v1792
        %v1859 = vpop.f32.mrb[0].mxu0
        %v1860 = vadd.f32 %v277, %v1859
        %v1861 = vpop.f32.mrb[0].mxu0
        %1862 = vdwg.mxu0
        %v1863 = vsub.f32 0.0, %v1860
        %v1864 = vmul.f32 %v1863, 1.442695
        %v1865 = vpow.pop %v1864
        %v1866 = vadd.f32 %v1865, 1.0
        %v1867 = vrcp.pop %v1866
        %v1868 = vlaneseq
        %v1869 = vshrl.u32 %v1868, 7
        %v1870 = vsub.s32 0, %v1869
        %v1871 = vrot.slane %v1867, %v1870
        %v1872 = vmul.f32 %v1712, %v1871
        %v1873 = vmul.f32 %v1713, %v1871
        %v1874 = vadd.f32 %v642, %v1872
        %v1875 = vadd.f32 %v643, %v1873
        %1876 = vst [vmem:[%s266] sm:$0xff] %v1874
        %1877 = vst [vmem:[%s266 + $0x8] sm:$0xff] %v1875
        %p1878 = scmp.lt.s32.totalorder %s18, 3
        %s1879 = scalar_select %p1878, %s18, 3
        %s1880 = smul.addr %s1879, 2
        %s1881 = smul.addr %s1880, 8
        %s1882 = scalar_lea.vmem %s6, %s1881
        // Predicated region
        $region49: #{conv_block_forward.1} parent=43 // pred_check
          %p1883 = pneg %p167
        $region50: #{conv_block_forward.1} parent=43 // pred_check_branch
          %1885 = sbr.rel (%p1883) target = $region52
        $region51: #{conv_block_forward.1} parent=43 // pred_region
          _
        $region52: #{conv_block_forward.1} parent=43 // pred_fallthru
          _
      $region44: #{conv_block_forward.1} parent=5 // pred_fallthru
        _
      %p1886 = scmp.le.s32.totalorder 2, %s13
      // Predicated region
      $region53: #{conv_block_forward.1} parent=5 // pred_check
        %p1887 = pneg %p1886
      $region54: #{conv_block_forward.1} parent=5 // pred_check_branch
        %1889 = sbr.rel (%p1887) target = $region56
      $region55: #{conv_block_forward.1} parent=5 // pred_region
        %s1890 = ssub.s32 %s13, 2
        // Predicated region
        $region57: #{conv_block_forward.1} parent=55 // pred_check
          %p1891 = pneg %p173
        $region58: #{conv_block_forward.1} parent=55 // pred_check_branch
          %1893 = sbr.rel (%p1891) target = $region60
        $region59: #{conv_block_forward.1} parent=55 // pred_region
          %p1894 = scmp.lt.s32.totalorder %s19, 3
          %s1895 = scalar_select %p1894, %s19, 3
          %s1896 = smul.addr %s1895, 2
          %s1897 = smul.addr %s1896, 8
          %s1898 = scalar_lea.vmem %s6, %s1897
        $region60: #{conv_block_forward.1} parent=55 // pred_fallthru
          _
      $region56: #{conv_block_forward.1} parent=5 // pred_fallthru
        _
    $region6: #{conv_block_forward.1} parent=1 // loop_footer
      %s17 = sadd.s32 1, %s13
    $region7: #{conv_block_forward.1} parent=1 // loop_footer_branch
      %12 = sbr.rel target = $region3
    $region8: #{conv_block_forward.1} parent=1 // loop_exit
      _
    %1899 = vsyncpa [#allocation3], 1
    %s1900 = scalar_lea.sflag [#allocation3], 1
    %1901 = vsyncpa %s1900, 1

</llo_original>
